<compile_context>
chip_gen: v7x
topology: tpu7x:2x2x1
jax: 0.10.0
libtpu: 0.0.40
codegen_flags: <defaults>
</compile_context>

<pallas_src>
import jax
import jax.numpy as jnp
from jax import lax
from jax.experimental import pallas as pl
from jax.experimental.pallas import tpu as pltpu

# ----------------------------- configuration --------------------------------
B = 2      # batch size
L = 8      # question sequence length
V = 64     # vocabulary size
E = 32     # word-embedding dim
H = 32     # question / relation hidden dim
N = 16     # num objects
DV = 32    # object feature dim
R = 4      # num semantic edge labels
TQ = 3     # number of question types (q_classifier output)
HJ = 32    # joint embedding dim
A = 16     # number of answers (classifier output)
BD = 4     # bounding-box dim (interface only; unused in the 'mul' fusion path)

assert E == H and DV == H and HJ == H, "packed weight slab assumes one shared 32-row contraction dim"

# --- packed weight-slab lane layout (every matrix has 32 rows) ---------------
C_WQ = 0                        # wq  (E,  H)
C_WV = C_WQ + H                 # wv  (DV, H)
C_WJ1 = C_WV + H                # wj1 (H,  H)
C_WJV = C_WJ1 + H               # wjv (H,  HJ)
C_QF = 128                      # fused q_self block: one full 128-lane tile
QF_QC = 0                       # wqc (H, TQ)
QF_QR = QF_QC + TQ              # wqr (H, H)
QF_J2 = QF_QR + H               # wj2 (H, H)
QF_JQ = QF_J2 + H               # wjq (H, HJ)
QF_END = QF_JQ + HJ             # = 99 useful lanes of the fused block
C_WC = C_QF + QF_END            # wc  (HJ, A)  (shares tile 1; its qproj lanes are ignored)
W_COLS = 256
assert C_WC + A <= W_COLS

# --- packed bias / row-vector slab (one (8,128) VMEM tile) -------------------
R_BQ, R_BQC, R_BC, R_WATT, R_WJA = 0, 1, 2, 3, 4
VEC_ROWS, VEC_COLS = 8, 128

# --- packed, lane-dense output layout ----------------------------------------
O_QTYPE = 0
O_LOGITS = O_QTYPE + TQ
O_ATT = O_LOGITS + A
OUT_COLS = 128

NEG_MASK = -1e30   # additive mask for cross-batch blocks of the relation attention


def regat_kernel(wemb_ref, v_ref, adjb_ref, wslab_ref, vec_ref, out_ref):
    f32 = jnp.float32
    wslab = wslab_ref[...]                           # (32, 256)  all weight matrices
    vec = vec_ref[...]                               # (8, 128)   biases + watt.T / wja.T

    wq = wslab[:, C_WQ:C_WQ + H]                     # (E, H)
    wv = wslab[:, C_WV:C_WV + H]                     # (DV, H)
    wj1 = wslab[:, C_WJ1:C_WJ1 + H]                  # (H, H)
    wjv = wslab[:, C_WJV:C_WJV + HJ]                 # (H, HJ)
    wqf = wslab[:, C_QF:C_QF + 128]                  # fused [wqc|wqr|wj2|wjq|0]
    wc = wslab[:, C_WC:C_WC + A]                     # (HJ, A)

    bq = vec[R_BQ:R_BQ + 1, 0:H]                     # (1, H)
    bqc = vec[R_BQC:R_BQC + 1, 0:TQ]                 # (1, TQ)
    bc = vec[R_BC:R_BC + 1, 0:A]                     # (1, A)
    watt_t = vec[R_WATT:R_WATT + 1, 0:H]             # (1, H)  == watt.T
    wja_t = vec[R_WJA:R_WJA + 1, 0:H]                # (1, H)  == wja.T

    # ---- q_emb.forward_all : per-token projection + tanh (batch folded in rows)
    q_seq = jnp.tanh(jnp.dot(wemb_ref[...], wq, preferred_element_type=f32) + bq)  # (B*L, H)

    # ---- q_att : token attention logits as one lane-dense row (MXU, no transpose)
    ql_row = lax.dot_general(watt_t, q_seq, (((1,), (1,)), ((), ())),
                             preferred_element_type=f32)              # (1, B*L)

    q_self_rows = []
    for b in range(B):                                                # static unroll, B=2
        lo = b * L
        logit_b = ql_row[:, lo:lo + L]                                # (1, L)
        m = jnp.max(logit_b, axis=-1, keepdims=True)
        e = jnp.exp(logit_b - m)
        attn_b = e / jnp.sum(e, axis=-1, keepdims=True)               # (1, L)
        q_self_rows.append(jnp.dot(attn_b, q_seq[lo:lo + L, :],
                                   preferred_element_type=f32))       # (1, H) via MXU
    q_self = jnp.concatenate(q_self_rows, axis=0)                     # (B, H)

    # ---- fused q_self projections: qtype / q_cond / wj2-term / wjq-term in one matmul
    qproj = jnp.dot(q_self, wqf, preferred_element_type=f32)          # (B, 128)
    q_type = qproj[:, QF_QC:QF_QC + TQ] + bqc                         # (B, TQ)
    q_cond = qproj[:, QF_QR:QF_QR + H]                                # (B, H)
    q_j2 = qproj[:, QF_J2:QF_J2 + H]                                  # (B, H)
    q_jq = qproj[:, QF_JQ:QF_JQ + HJ]                                 # (B, HJ)

    # ---- broadcast per-batch conditioning rows to all N objects (sublane broadcast)
    q_cond_full = jnp.concatenate(
        [jnp.broadcast_to(q_cond[b:b + 1, :], (N, H)) for b in range(B)], axis=0)   # (B*N, H)
    q_j2_full = jnp.concatenate(
        [jnp.broadcast_to(q_j2[b:b + 1, :], (N, H)) for b in range(B)], axis=0)     # (B*N, H)

    # ---- v_relation (semantic): ONE block-diagonal graph attention for the whole batch
    v_proj = jnp.dot(v_ref[...], wv, preferred_element_type=f32)      # (B*N, H)
    inv_sqrt_h = 1.0 / float(H) ** 0.5
    scores = (lax.dot_general(v_proj, v_proj, (((1,), (1,)), ((), ())),
                              preferred_element_type=f32) * inv_sqrt_h
              + adjb_ref[...])                                        # (B*N, B*N) masked
    m = jnp.max(scores, axis=-1, keepdims=True)
    e = jnp.exp(scores - m)
    att_rel = e / jnp.sum(e, axis=-1, keepdims=True)                  # (B*N, B*N)
    v_agg = jnp.dot(att_rel, v_proj, preferred_element_type=f32)      # (B*N, H)
    v_emb = jnp.maximum(v_agg + q_cond_full, 0.0)                     # (B*N, H)

    # ---- joint_embedding: top-down object attention + 'mul' fusion
    joint = jnp.tanh(jnp.dot(v_emb, wj1, preferred_element_type=f32)
                     + q_j2_full)                                     # (B*N, H)
    ja_row = lax.dot_general(wja_t, joint, (((1,), (1,)), ((), ())),
                             preferred_element_type=f32)              # (1, B*N) lane-dense

    joint_rows = []
    att_rows = []
    for b in range(B):                                                # static unroll, B=2
        lo = b * N
        r = ja_row[:, lo:lo + N]                                      # (1, N)
        m2 = jnp.max(r, axis=-1, keepdims=True)
        e2 = jnp.exp(r - m2)
        att_obj = e2 / jnp.sum(e2, axis=-1, keepdims=True)            # (1, N)
        att_rows.append(att_obj)
        v_att = jnp.dot(att_obj, v_emb[lo:lo + N, :],
                        preferred_element_type=f32)                   # (1, H) via MXU
        joint_rows.append(jnp.dot(v_att, wjv, preferred_element_type=f32)
                          * q_jq[b:b + 1, :])                         # (1, HJ)

    joint_emb = jnp.concatenate(joint_rows, axis=0)                   # (B, HJ)
    att_lane = jnp.concatenate(att_rows, axis=0)                      # (B, N)

    logits = jnp.dot(joint_emb, wc, preferred_element_type=f32) + bc  # (B, A)

    # single lane-dense (B, 128) store: [q_type | logits | att | zeros]
    pad = jnp.zeros((B, OUT_COLS - (TQ + A + N)), f32)
    out_ref[...] = jnp.concatenate([q_type, logits, att_lane, pad], axis=-1)


def _pack_weights(p):
    """Pack all small weights into one (32,256) slab + one (8,128) vector slab."""
    wslab = jnp.zeros((H, W_COLS), jnp.float32)
    wslab = wslab.at[:, C_WQ:C_WQ + H].set(p['wq'])
    wslab = wslab.at[:, C_WV:C_WV + H].set(p['wv'])
    wslab = wslab.at[:, C_WJ1:C_WJ1 + H].set(p['wj1'])
    wslab = wslab.at[:, C_WJV:C_WJV + HJ].set(p['wjv'])
    wslab = wslab.at[:, C_QF + QF_QC:C_QF + QF_QC + TQ].set(p['wqc'])
    wslab = wslab.at[:, C_QF + QF_QR:C_QF + QF_QR + H].set(p['wqr'])
    wslab = wslab.at[:, C_QF + QF_J2:C_QF + QF_J2 + H].set(p['wj2'])
    wslab = wslab.at[:, C_QF + QF_JQ:C_QF + QF_JQ + HJ].set(p['wjq'])
    wslab = wslab.at[:, C_WC:C_WC + A].set(p['wc'])

    vec = jnp.zeros((VEC_ROWS, VEC_COLS), jnp.float32)
    vec = vec.at[R_BQ, 0:H].set(p['bq'][0])
    vec = vec.at[R_BQC, 0:TQ].set(p['bqc'][0])
    vec = vec.at[R_BC, 0:A].set(p['bc'][0])
    vec = vec.at[R_WATT, 0:H].set(p['watt'][:, 0])
    vec = vec.at[R_WJA, 0:H].set(p['wja'][:, 0])
    return wslab, vec


@jax.jit
def regat_forward(params, v, q_tokens, sem_adj):
    """ReGAT forward. Returns (q_type [B,TQ], logits [B,A], att [B,N,1])."""
    # plain-JAX glue: embedding lookup, batch folding, edge-label pre-weighting,
    # block-diagonal bias assembly, and weight packing.
    wemb = jnp.take(params['emb_table'], q_tokens, axis=0).reshape(B * L, E)
    v_flat = v.astype(jnp.float32).reshape(B * N, DV)

    adj_bias = jnp.einsum('bnmr,r->bnm', sem_adj.astype(jnp.float32),
                          params['w_edge'])                           # (B, N, N)
    # block-diagonal bias: per-example adjacency bias on the diagonal blocks,
    # a large negative additive mask everywhere else (cross-batch attention = 0).
    adjb_block = jnp.full((B * N, B * N), NEG_MASK, jnp.float32)
    for b in range(B):
        adjb_block = adjb_block.at[b * N:(b + 1) * N,
                                   b * N:(b + 1) * N].set(adj_bias[b])

    wslab, vec = _pack_weights(params)

    out = pl.pallas_call(
        regat_kernel,
        grid=(1,),
        in_specs=[
            pl.BlockSpec((B * L, E), lambda i: (0, 0)),
            pl.BlockSpec((B * N, DV), lambda i: (0, 0)),
            pl.BlockSpec((B * N, B * N), lambda i: (0, 0)),
            pl.BlockSpec((H, W_COLS), lambda i: (0, 0)),
            pl.BlockSpec((VEC_ROWS, VEC_COLS), lambda i: (0, 0)),
        ],
        out_specs=pl.BlockSpec((B, OUT_COLS), lambda i: (0, 0)),
        out_shape=jax.ShapeDtypeStruct((B, OUT_COLS), jnp.float32),
        compiler_params=pltpu.CompilerParams(
            dimension_semantics=("arbitrary",)),
    )(wemb, v_flat, adjb_block, wslab, vec)

    q_type = out[:, O_QTYPE:O_QTYPE + TQ]
    logits = out[:, O_LOGITS:O_LOGITS + A]
    att = out[:, O_ATT:O_ATT + N].reshape(B, N, 1)
    return q_type, logits, att


def init_params(key):
    ks = jax.random.split(key, 18)
    w = lambda k, shape, s=0.1: (s * jax.random.normal(k, shape)).astype(jnp.float32)
    return {
        'emb_table': w(ks[0], (V, E), 0.2),
        'wq': w(ks[1], (E, H)),
        'bq': w(ks[2], (1, H), 0.01),
        'watt': w(ks[3], (H, 1)),
        'wqc': w(ks[4], (H, TQ)),
        'bqc': w(ks[5], (1, TQ), 0.01),
        'w_edge': w(ks[6], (R,), 0.5),
        'wv': w(ks[7], (DV, H)),
        'wqr': w(ks[8], (H, H)),
        'wj1': w(ks[9], (H, H)),
        'wj2': w(ks[10], (H, H)),
        'wja': w(ks[11], (H, 1)),
        'wjv': w(ks[12], (H, HJ)),
        'wjq': w(ks[13], (H, HJ)),
        'wc': w(ks[14], (HJ, A)),
        'bc': w(ks[15], (1, A), 0.01),
    }


if __name__ == "__main__":
    root = jax.random.PRNGKey(0)
    kp, kv, kq, ka, kb = jax.random.split(root, 5)

    params = init_params(kp)

    v = jax.random.normal(kv, (B, N, DV), dtype=jnp.float32)          # object feats
    q = jax.random.randint(kq, (B, L), 0, V, dtype=jnp.int32)         # question tokens
    sem_adj = jax.random.bernoulli(ka, 0.3, (B, N, N, R)).astype(jnp.float32)
    bboxes = jax.random.uniform(kb, (B, N, BD), dtype=jnp.float32)    # interface only
    # TODO(synk): b / implicit_pos_emb / spa_adj_matrix / labels are unused in the
    # semantic + 'mul'-fusion branch of ReGAT.forward, so they are not consumed.
    del bboxes

    q_type, logits, att = regat_forward(params, v, q, sem_adj)
    jax.block_until_ready((q_type, logits, att))

    assert q_type.shape == (B, TQ)
    assert logits.shape == (B, A)
    assert att.shape == (B, N, 1)
    print("KERNEL_OK")
</pallas_src>

<mosaic_0001>
module attributes {stable_mosaic.version = 11 : i64} {
  func.func @regat_kernel(%arg0: i32, %arg1: memref<16x32xf32, #tpu.memory_space<vmem>>, %arg2: memref<32x32xf32, #tpu.memory_space<vmem>>, %arg3: memref<32x32xf32, #tpu.memory_space<vmem>>, %arg4: memref<32x256xf32, #tpu.memory_space<vmem>>, %arg5: memref<8x128xf32, #tpu.memory_space<vmem>>, %arg6: memref<2x128xf32, #tpu.memory_space<vmem>>) attributes {dimension_semantics = [#tpu.dimension_semantics<arbitrary>], iteration_bounds = array<i64: 1>, scalar_prefetch = 0 : i64, scratch_operands = 0 : i64, tpu.core_type = #tpu.core_type<tc>, window_params = [{pipeline_mode = #tpu.pipeline_mode<synchronous>, transform_indices = @transform_0, window_bounds = array<i64: 16, 32>}, {pipeline_mode = #tpu.pipeline_mode<synchronous>, transform_indices = @transform_1, window_bounds = array<i64: 32, 32>}, {pipeline_mode = #tpu.pipeline_mode<synchronous>, transform_indices = @transform_2, window_bounds = array<i64: 32, 32>}, {pipeline_mode = #tpu.pipeline_mode<synchronous>, transform_indices = @transform_3, window_bounds = array<i64: 32, 256>}, {pipeline_mode = #tpu.pipeline_mode<synchronous>, transform_indices = @transform_4, window_bounds = array<i64: 8, 128>}, {pipeline_mode = #tpu.pipeline_mode<synchronous>, transform_indices = @transform_5, window_bounds = array<i64: 2, 128>}]} {
    %c0 = arith.constant 0 : index
    %c0_0 = arith.constant 0 : index
    %0 = vector.load %arg4[%c0, %c0_0] : memref<32x256xf32, #tpu.memory_space<vmem>>, vector<32x256xf32>
    %c0_1 = arith.constant 0 : index
    %c0_2 = arith.constant 0 : index
    %1 = vector.load %arg5[%c0_1, %c0_2] : memref<8x128xf32, #tpu.memory_space<vmem>>, vector<8x128xf32>
    %2 = vector.extract_strided_slice %0 {offsets = [0, 0], sizes = [32, 32], strides = [1, 1]} : vector<32x256xf32> to vector<32x32xf32>
    %3 = vector.extract_strided_slice %0 {offsets = [0, 32], sizes = [32, 32], strides = [1, 1]} : vector<32x256xf32> to vector<32x32xf32>
    %4 = vector.extract_strided_slice %0 {offsets = [0, 64], sizes = [32, 32], strides = [1, 1]} : vector<32x256xf32> to vector<32x32xf32>
    %5 = vector.extract_strided_slice %0 {offsets = [0, 96], sizes = [32, 32], strides = [1, 1]} : vector<32x256xf32> to vector<32x32xf32>
    %6 = vector.extract_strided_slice %0 {offsets = [0, 128], sizes = [32, 128], strides = [1, 1]} : vector<32x256xf32> to vector<32x128xf32>
    %7 = vector.extract_strided_slice %0 {offsets = [0, 227], sizes = [32, 16], strides = [1, 1]} : vector<32x256xf32> to vector<32x16xf32>
    %8 = vector.extract_strided_slice %1 {offsets = [0, 0], sizes = [1, 32], strides = [1, 1]} : vector<8x128xf32> to vector<1x32xf32>
    %9 = vector.extract_strided_slice %1 {offsets = [1, 0], sizes = [1, 3], strides = [1, 1]} : vector<8x128xf32> to vector<1x3xf32>
    %10 = vector.extract_strided_slice %1 {offsets = [2, 0], sizes = [1, 16], strides = [1, 1]} : vector<8x128xf32> to vector<1x16xf32>
    %11 = vector.extract_strided_slice %1 {offsets = [3, 0], sizes = [1, 32], strides = [1, 1]} : vector<8x128xf32> to vector<1x32xf32>
    %12 = vector.extract_strided_slice %1 {offsets = [4, 0], sizes = [1, 32], strides = [1, 1]} : vector<8x128xf32> to vector<1x32xf32>
    %c0_3 = arith.constant 0 : index
    %c0_4 = arith.constant 0 : index
    %13 = vector.load %arg1[%c0_3, %c0_4] : memref<16x32xf32, #tpu.memory_space<vmem>>, vector<16x32xf32>
    %cst = arith.constant dense<0.000000e+00> : vector<16x32xf32>
    %14 = tpu.matmul %13, %2, %cst {dimension_numbers = #tpu.dot_dimension_numbers<[1], [0], [0], [1], [0, 0, 1, 1], [], []>} : vector<16x32xf32>, vector<32x32xf32>, vector<16x32xf32> -> vector<16x32xf32>
    %15 = vector.broadcast %8 : vector<1x32xf32> to vector<16x32xf32>
    %16 = arith.addf %14, %15 : vector<16x32xf32>
    %17 = math.tanh %16 : vector<16x32xf32>
    %cst_5 = arith.constant dense<0.000000e+00> : vector<1x16xf32>
    %18 = tpu.matmul %11, %17, %cst_5 {dimension_numbers = #tpu.dot_dimension_numbers<[1], [1], [0], [0], [0, 0, 1, 0], [], []>} : vector<1x32xf32>, vector<16x32xf32>, vector<1x16xf32> -> vector<1x16xf32>
    %19 = vector.extract_strided_slice %18 {offsets = [0, 0], sizes = [1, 8], strides = [1, 1]} : vector<1x16xf32> to vector<1x8xf32>
    %cst_6 = arith.constant dense<0xFF800000> : vector<1xf32>
    %20 = vector.multi_reduction <maximumf>, %19, %cst_6 [1] : vector<1x8xf32> to vector<1xf32>
    %21 = vector.shape_cast %20 : vector<1xf32> to vector<1x1xf32>
    %22 = vector.broadcast %21 : vector<1x1xf32> to vector<1x8xf32>
    %23 = arith.subf %19, %22 : vector<1x8xf32>
    %24 = math.exp %23 : vector<1x8xf32>
    %cst_7 = arith.constant dense<0.000000e+00> : vector<1xf32>
    %25 = vector.multi_reduction <add>, %24, %cst_7 [1] : vector<1x8xf32> to vector<1xf32>
    %26 = vector.shape_cast %25 : vector<1xf32> to vector<1x1xf32>
    %27 = vector.broadcast %26 : vector<1x1xf32> to vector<1x8xf32>
    %28 = arith.divf %24, %27 : vector<1x8xf32>
    %29 = vector.extract_strided_slice %17 {offsets = [0, 0], sizes = [8, 32], strides = [1, 1]} : vector<16x32xf32> to vector<8x32xf32>
    %cst_8 = arith.constant dense<0.000000e+00> : vector<1x32xf32>
    %30 = tpu.matmul %28, %29, %cst_8 {dimension_numbers = #tpu.dot_dimension_numbers<[1], [0], [0], [1], [0, 0, 1, 1], [], []>} : vector<1x8xf32>, vector<8x32xf32>, vector<1x32xf32> -> vector<1x32xf32>
    %31 = vector.extract_strided_slice %18 {offsets = [0, 8], sizes = [1, 8], strides = [1, 1]} : vector<1x16xf32> to vector<1x8xf32>
    %cst_9 = arith.constant dense<0xFF800000> : vector<1xf32>
    %32 = vector.multi_reduction <maximumf>, %31, %cst_9 [1] : vector<1x8xf32> to vector<1xf32>
    %33 = vector.shape_cast %32 : vector<1xf32> to vector<1x1xf32>
    %34 = vector.broadcast %33 : vector<1x1xf32> to vector<1x8xf32>
    %35 = arith.subf %31, %34 : vector<1x8xf32>
    %36 = math.exp %35 : vector<1x8xf32>
    %cst_10 = arith.constant dense<0.000000e+00> : vector<1xf32>
    %37 = vector.multi_reduction <add>, %36, %cst_10 [1] : vector<1x8xf32> to vector<1xf32>
    %38 = vector.shape_cast %37 : vector<1xf32> to vector<1x1xf32>
    %39 = vector.broadcast %38 : vector<1x1xf32> to vector<1x8xf32>
    %40 = arith.divf %36, %39 : vector<1x8xf32>
    %41 = vector.extract_strided_slice %17 {offsets = [8, 0], sizes = [8, 32], strides = [1, 1]} : vector<16x32xf32> to vector<8x32xf32>
    %cst_11 = arith.constant dense<0.000000e+00> : vector<1x32xf32>
    %42 = tpu.matmul %40, %41, %cst_11 {dimension_numbers = #tpu.dot_dimension_numbers<[1], [0], [0], [1], [0, 0, 1, 1], [], []>} : vector<1x8xf32>, vector<8x32xf32>, vector<1x32xf32> -> vector<1x32xf32>
    %43 = tpu.concatenate %30, %42 in 0 : vector<1x32xf32>, vector<1x32xf32> -> vector<2x32xf32>
    %cst_12 = arith.constant dense<0.000000e+00> : vector<2x128xf32>
    %44 = tpu.matmul %43, %6, %cst_12 {dimension_numbers = #tpu.dot_dimension_numbers<[1], [0], [0], [1], [0, 0, 1, 1], [], []>} : vector<2x32xf32>, vector<32x128xf32>, vector<2x128xf32> -> vector<2x128xf32>
    %45 = vector.extract_strided_slice %44 {offsets = [0, 0], sizes = [2, 3], strides = [1, 1]} : vector<2x128xf32> to vector<2x3xf32>
    %46 = vector.broadcast %9 : vector<1x3xf32> to vector<2x3xf32>
    %47 = arith.addf %45, %46 : vector<2x3xf32>
    %48 = vector.extract_strided_slice %44 {offsets = [0, 3], sizes = [2, 32], strides = [1, 1]} : vector<2x128xf32> to vector<2x32xf32>
    %49 = vector.extract_strided_slice %44 {offsets = [0, 35], sizes = [2, 32], strides = [1, 1]} : vector<2x128xf32> to vector<2x32xf32>
    %50 = vector.extract_strided_slice %44 {offsets = [0, 67], sizes = [2, 32], strides = [1, 1]} : vector<2x128xf32> to vector<2x32xf32>
    %51 = vector.extract_strided_slice %48 {offsets = [0, 0], sizes = [1, 32], strides = [1, 1]} : vector<2x32xf32> to vector<1x32xf32>
    %52 = vector.shape_cast %51 : vector<1x32xf32> to vector<1x32xf32>
    %53 = vector.broadcast %52 : vector<1x32xf32> to vector<16x32xf32>
    %54 = vector.extract_strided_slice %48 {offsets = [1, 0], sizes = [1, 32], strides = [1, 1]} : vector<2x32xf32> to vector<1x32xf32>
    %55 = vector.shape_cast %54 : vector<1x32xf32> to vector<1x32xf32>
    %56 = vector.broadcast %55 : vector<1x32xf32> to vector<16x32xf32>
    %57 = tpu.concatenate %53, %56 in 0 : vector<16x32xf32>, vector<16x32xf32> -> vector<32x32xf32>
    %58 = vector.extract_strided_slice %49 {offsets = [0, 0], sizes = [1, 32], strides = [1, 1]} : vector<2x32xf32> to vector<1x32xf32>
    %59 = vector.shape_cast %58 : vector<1x32xf32> to vector<1x32xf32>
    %60 = vector.broadcast %59 : vector<1x32xf32> to vector<16x32xf32>
    %61 = vector.extract_strided_slice %49 {offsets = [1, 0], sizes = [1, 32], strides = [1, 1]} : vector<2x32xf32> to vector<1x32xf32>
    %62 = vector.shape_cast %61 : vector<1x32xf32> to vector<1x32xf32>
    %63 = vector.broadcast %62 : vector<1x32xf32> to vector<16x32xf32>
    %64 = tpu.concatenate %60, %63 in 0 : vector<16x32xf32>, vector<16x32xf32> -> vector<32x32xf32>
    %c0_13 = arith.constant 0 : index
    %c0_14 = arith.constant 0 : index
    %65 = vector.load %arg2[%c0_13, %c0_14] : memref<32x32xf32, #tpu.memory_space<vmem>>, vector<32x32xf32>
    %cst_15 = arith.constant dense<0.000000e+00> : vector<32x32xf32>
    %66 = tpu.matmul %65, %3, %cst_15 {dimension_numbers = #tpu.dot_dimension_numbers<[1], [0], [0], [1], [0, 0, 1, 1], [], []>} : vector<32x32xf32>, vector<32x32xf32>, vector<32x32xf32> -> vector<32x32xf32>
    %cst_16 = arith.constant dense<0.000000e+00> : vector<32x32xf32>
    %67 = tpu.matmul %66, %66, %cst_16 {dimension_numbers = #tpu.dot_dimension_numbers<[1], [1], [0], [0], [0, 0, 1, 0], [], []>} : vector<32x32xf32>, vector<32x32xf32>, vector<32x32xf32> -> vector<32x32xf32>
    %cst_17 = arith.constant 0.176776692 : f32
    %68 = vector.broadcast %cst_17 : f32 to vector<32x32xf32>
    %69 = arith.mulf %67, %68 : vector<32x32xf32>
    %c0_18 = arith.constant 0 : index
    %c0_19 = arith.constant 0 : index
    %70 = vector.load %arg3[%c0_18, %c0_19] : memref<32x32xf32, #tpu.memory_space<vmem>>, vector<32x32xf32>
    %71 = arith.addf %69, %70 : vector<32x32xf32>
    %cst_20 = arith.constant dense<0xFF800000> : vector<32xf32>
    %72 = vector.multi_reduction <maximumf>, %71, %cst_20 [1] : vector<32x32xf32> to vector<32xf32>
    %73 = vector.shape_cast %72 : vector<32xf32> to vector<32x1xf32>
    %74 = vector.broadcast %73 : vector<32x1xf32> to vector<32x32xf32>
    %75 = arith.subf %71, %74 : vector<32x32xf32>
    %76 = math.exp %75 : vector<32x32xf32>
    %cst_21 = arith.constant dense<0.000000e+00> : vector<32xf32>
    %77 = vector.multi_reduction <add>, %76, %cst_21 [1] : vector<32x32xf32> to vector<32xf32>
    %78 = vector.shape_cast %77 : vector<32xf32> to vector<32x1xf32>
    %79 = vector.broadcast %78 : vector<32x1xf32> to vector<32x32xf32>
    %80 = arith.divf %76, %79 : vector<32x32xf32>
    %cst_22 = arith.constant dense<0.000000e+00> : vector<32x32xf32>
    %81 = tpu.matmul %80, %66, %cst_22 {dimension_numbers = #tpu.dot_dimension_numbers<[1], [0], [0], [1], [0, 0, 1, 1], [], []>} : vector<32x32xf32>, vector<32x32xf32>, vector<32x32xf32> -> vector<32x32xf32>
    %82 = arith.addf %81, %57 : vector<32x32xf32>
    %cst_23 = arith.constant 0.000000e+00 : f32
    %83 = vector.broadcast %cst_23 : f32 to vector<32x32xf32>
    %84 = arith.maximumf %82, %83 : vector<32x32xf32>
    %cst_24 = arith.constant dense<0.000000e+00> : vector<32x32xf32>
    %85 = tpu.matmul %84, %4, %cst_24 {dimension_numbers = #tpu.dot_dimension_numbers<[1], [0], [0], [1], [0, 0, 1, 1], [], []>} : vector<32x32xf32>, vector<32x32xf32>, vector<32x32xf32> -> vector<32x32xf32>
    %86 = arith.addf %85, %64 : vector<32x32xf32>
    %87 = math.tanh %86 : vector<32x32xf32>
    %cst_25 = arith.constant dense<0.000000e+00> : vector<1x32xf32>
    %88 = tpu.matmul %12, %87, %cst_25 {dimension_numbers = #tpu.dot_dimension_numbers<[1], [1], [0], [0], [0, 0, 1, 0], [], []>} : vector<1x32xf32>, vector<32x32xf32>, vector<1x32xf32> -> vector<1x32xf32>
    %89 = vector.extract_strided_slice %88 {offsets = [0, 0], sizes = [1, 16], strides = [1, 1]} : vector<1x32xf32> to vector<1x16xf32>
    %cst_26 = arith.constant dense<0xFF800000> : vector<1xf32>
    %90 = vector.multi_reduction <maximumf>, %89, %cst_26 [1] : vector<1x16xf32> to vector<1xf32>
    %91 = vector.shape_cast %90 : vector<1xf32> to vector<1x1xf32>
    %92 = vector.broadcast %91 : vector<1x1xf32> to vector<1x16xf32>
    %93 = arith.subf %89, %92 : vector<1x16xf32>
    %94 = math.exp %93 : vector<1x16xf32>
    %cst_27 = arith.constant dense<0.000000e+00> : vector<1xf32>
    %95 = vector.multi_reduction <add>, %94, %cst_27 [1] : vector<1x16xf32> to vector<1xf32>
    %96 = vector.shape_cast %95 : vector<1xf32> to vector<1x1xf32>
    %97 = vector.broadcast %96 : vector<1x1xf32> to vector<1x16xf32>
    %98 = arith.divf %94, %97 : vector<1x16xf32>
    %99 = vector.extract_strided_slice %84 {offsets = [0, 0], sizes = [16, 32], strides = [1, 1]} : vector<32x32xf32> to vector<16x32xf32>
    %cst_28 = arith.constant dense<0.000000e+00> : vector<1x32xf32>
    %100 = tpu.matmul %98, %99, %cst_28 {dimension_numbers = #tpu.dot_dimension_numbers<[1], [0], [0], [1], [0, 0, 1, 1], [], []>} : vector<1x16xf32>, vector<16x32xf32>, vector<1x32xf32> -> vector<1x32xf32>
    %cst_29 = arith.constant dense<0.000000e+00> : vector<1x32xf32>
    %101 = tpu.matmul %100, %5, %cst_29 {dimension_numbers = #tpu.dot_dimension_numbers<[1], [0], [0], [1], [0, 0, 1, 1], [], []>} : vector<1x32xf32>, vector<32x32xf32>, vector<1x32xf32> -> vector<1x32xf32>
    %102 = vector.extract_strided_slice %50 {offsets = [0, 0], sizes = [1, 32], strides = [1, 1]} : vector<2x32xf32> to vector<1x32xf32>
    %103 = arith.mulf %101, %102 : vector<1x32xf32>
    %104 = vector.extract_strided_slice %88 {offsets = [0, 16], sizes = [1, 16], strides = [1, 1]} : vector<1x32xf32> to vector<1x16xf32>
    %cst_30 = arith.constant dense<0xFF800000> : vector<1xf32>
    %105 = vector.multi_reduction <maximumf>, %104, %cst_30 [1] : vector<1x16xf32> to vector<1xf32>
    %106 = vector.shape_cast %105 : vector<1xf32> to vector<1x1xf32>
    %107 = vector.broadcast %106 : vector<1x1xf32> to vector<1x16xf32>
    %108 = arith.subf %104, %107 : vector<1x16xf32>
    %109 = math.exp %108 : vector<1x16xf32>
    %cst_31 = arith.constant dense<0.000000e+00> : vector<1xf32>
    %110 = vector.multi_reduction <add>, %109, %cst_31 [1] : vector<1x16xf32> to vector<1xf32>
    %111 = vector.shape_cast %110 : vector<1xf32> to vector<1x1xf32>
    %112 = vector.broadcast %111 : vector<1x1xf32> to vector<1x16xf32>
    %113 = arith.divf %109, %112 : vector<1x16xf32>
    %114 = vector.extract_strided_slice %84 {offsets = [16, 0], sizes = [16, 32], strides = [1, 1]} : vector<32x32xf32> to vector<16x32xf32>
    %cst_32 = arith.constant dense<0.000000e+00> : vector<1x32xf32>
    %115 = tpu.matmul %113, %114, %cst_32 {dimension_numbers = #tpu.dot_dimension_numbers<[1], [0], [0], [1], [0, 0, 1, 1], [], []>} : vector<1x16xf32>, vector<16x32xf32>, vector<1x32xf32> -> vector<1x32xf32>
    %cst_33 = arith.constant dense<0.000000e+00> : vector<1x32xf32>
    %116 = tpu.matmul %115, %5, %cst_33 {dimension_numbers = #tpu.dot_dimension_numbers<[1], [0], [0], [1], [0, 0, 1, 1], [], []>} : vector<1x32xf32>, vector<32x32xf32>, vector<1x32xf32> -> vector<1x32xf32>
    %117 = vector.extract_strided_slice %50 {offsets = [1, 0], sizes = [1, 32], strides = [1, 1]} : vector<2x32xf32> to vector<1x32xf32>
    %118 = arith.mulf %116, %117 : vector<1x32xf32>
    %119 = tpu.concatenate %103, %118 in 0 : vector<1x32xf32>, vector<1x32xf32> -> vector<2x32xf32>
    %120 = tpu.concatenate %98, %113 in 0 : vector<1x16xf32>, vector<1x16xf32> -> vector<2x16xf32>
    %cst_34 = arith.constant dense<0.000000e+00> : vector<2x16xf32>
    %121 = tpu.matmul %119, %7, %cst_34 {dimension_numbers = #tpu.dot_dimension_numbers<[1], [0], [0], [1], [0, 0, 1, 1], [], []>} : vector<2x32xf32>, vector<32x16xf32>, vector<2x16xf32> -> vector<2x16xf32>
    %122 = vector.broadcast %10 : vector<1x16xf32> to vector<2x16xf32>
    %123 = arith.addf %121, %122 : vector<2x16xf32>
    %cst_35 = arith.constant 0.000000e+00 : f32
    %124 = vector.broadcast %cst_35 : f32 to vector<2x93xf32>
    %125 = tpu.concatenate %47, %123, %120, %124 in 1 : vector<2x3xf32>, vector<2x16xf32>, vector<2x16xf32>, vector<2x93xf32> -> vector<2x128xf32>
    %c0_36 = arith.constant 0 : index
    %c0_37 = arith.constant 0 : index
    %126 = vector.load %arg6[%c0_36, %c0_37] : memref<2x128xf32, #tpu.memory_space<vmem>>, vector<2x128xf32>
    tpu.vector_store %arg6[%c0_36, %c0_37], %125 {strides = array<i32>} : memref<2x128xf32, #tpu.memory_space<vmem>>, vector<2x128xf32>,
    return
  }
  func.func @transform_0(%arg0: i32) -> (i32, i32) {
    %c0_i32 = arith.constant 0 : i32
    %c0_i32_0 = arith.constant 0 : i32
    %c0_i32_1 = arith.constant 0 : i32
    return %c0_i32, %c0_i32_0 : i32, i32
  }
  func.func @transform_1(%arg0: i32) -> (i32, i32) {
    %c0_i32 = arith.constant 0 : i32
    %c0_i32_0 = arith.constant 0 : i32
    %c0_i32_1 = arith.constant 0 : i32
    return %c0_i32, %c0_i32_0 : i32, i32
  }
  func.func @transform_2(%arg0: i32) -> (i32, i32) {
    %c0_i32 = arith.constant 0 : i32
    %c0_i32_0 = arith.constant 0 : i32
    %c0_i32_1 = arith.constant 0 : i32
    return %c0_i32, %c0_i32_0 : i32, i32
  }
  func.func @transform_3(%arg0: i32) -> (i32, i32) {
    %c0_i32 = arith.constant 0 : i32
    %c0_i32_0 = arith.constant 0 : i32
    %c0_i32_1 = arith.constant 0 : i32
    return %c0_i32, %c0_i32_0 : i32, i32
  }
  func.func @transform_4(%arg0: i32) -> (i32, i32) {
    %c0_i32 = arith.constant 0 : i32
    %c0_i32_0 = arith.constant 0 : i32
    %c0_i32_1 = arith.constant 0 : i32
    return %c0_i32, %c0_i32_0 : i32, i32
  }
  func.func @transform_5(%arg0: i32) -> (i32, i32) {
    %c0_i32 = arith.constant 0 : i32
    %c0_i32_0 = arith.constant 0 : i32
    %c0_i32_1 = arith.constant 0 : i32
    return %c0_i32, %c0_i32_0 : i32, i32
  }
}

</mosaic_0001>

<llo_original>
// kernel: regat_forward.1
$region0: #{regat_forward.1}
  #allocation0 [shape = 'u32[]', space=smem, size = 0x4, offset = 0x4, fixed_abs, tag = 'smem constant byte address 0x4 - core index']
  #allocation1 [shape = 'u32[144,128]{1,0:T(1,128)}', space=vmem, size = 0x12000, scoped, tag = 'internal scratch']
  %s0 = inlined_call_operand.vmem [shape: f32[16,32], index: 0, kind: input, shape index: {}]
  %s1 = inlined_call_operand.vmem [shape: f32[32,32], index: 1, kind: input, shape index: {}]
  %s2 = inlined_call_operand.vmem [shape: f32[32,32], index: 2, kind: input, shape index: {}]
  %s3 = inlined_call_operand.vmem [shape: f32[32,256], index: 3, kind: input, shape index: {}]
  %s4 = inlined_call_operand.vmem [shape: f32[8,128], index: 4, kind: input, shape index: {}]
  %s5 = inlined_call_operand.vmem [shape: f32[2,128], index: 5, kind: output, shape index: {}]
  %s6 = sld [smem:[#allocation0]]
  $region30: #{regat_forward.1} parent=0
    _
  %s8 = ssub.s32 1, %s6
  %s9 = scalar_select 0, %s8, %s6
  // Predicated region
  $region2: #{regat_forward.1} parent=0 // pred_check
    _
  $region3: #{regat_forward.1} parent=0 // pred_check_branch
    %11 = sbr.rel (0) target = $region5
  $region4: #{regat_forward.1} parent=0 // pred_region
    _
  $region5: #{regat_forward.1} parent=0 // pred_fallthru
    _
  // Predicated region
  $region6: #{regat_forward.1} parent=0 // pred_check
    _
  $region7: #{regat_forward.1} parent=0 // pred_check_branch
    %13 = sbr.rel (0) target = $region9
  $region8: #{regat_forward.1} parent=0 // pred_region
    _
  $region9: #{regat_forward.1} parent=0 // pred_fallthru
    _
  // Predicated region
  $region10: #{regat_forward.1} parent=0 // pred_check
    _
  $region11: #{regat_forward.1} parent=0 // pred_check_branch
    %15 = sbr.rel (0) target = $region13
  $region12: #{regat_forward.1} parent=0 // pred_region
    _
  $region13: #{regat_forward.1} parent=0 // pred_fallthru
    _
  // Predicated region
  $region14: #{regat_forward.1} parent=0 // pred_check
    _
  $region15: #{regat_forward.1} parent=0 // pred_check_branch
    %17 = sbr.rel (0) target = $region17
  $region16: #{regat_forward.1} parent=0 // pred_region
    _
  $region17: #{regat_forward.1} parent=0 // pred_fallthru
    _
  // Predicated region
  $region18: #{regat_forward.1} parent=0 // pred_check
    _
  $region19: #{regat_forward.1} parent=0 // pred_check_branch
    %19 = sbr.rel (0) target = $region21
  $region20: #{regat_forward.1} parent=0 // pred_region
    _
  $region21: #{regat_forward.1} parent=0 // pred_fallthru
    _
  %v20 = vld [vmem:[%s3] sm:$0xff]
  %v21 = vld [vmem:[%s3 + $0x8] sm:$0xff]
  %v22 = vld [vmem:[%s3 + $0x10] sm:$0xff]
  %v23 = vld [vmem:[%s3 + $0x18] sm:$0xff]
  %v24 = vld [vmem:[%s3 + $0x20] sm:$0xff]
  %v25 = vld [vmem:[%s3 + $0x28] sm:$0xff]
  %v26 = vld [vmem:[%s3 + $0x30] sm:$0xff]
  %v27 = vld [vmem:[%s3 + $0x38] sm:$0xff]
  %v28 = vld [vmem:[%s4] sm:$0xff]
  %v29 = vld [vmem:[%s0] sm:$0xff]
  %v30 = vld [vmem:[%s0 + $0x8] sm:$0xff]
  %v31 = vlaneseq
  %v32 = vshrl.u32 %v31, 7
  %v33 = vsub.s32 0, %v32
  %v34 = vrot.slane %v28, %v33
  %vm35 = vcmask 261120
  %v37 = vsel %vm35, %v29, 0
  %v40 = vsel %vm35, %v30, 0
  %42 = vmatprep.subr.mxu0 0.0
  %43 = vmatpush1.msra.mxu0 %v20
  %44 = vmatprep.subr.mxu0 0.0
  %45 = vmatpush1.msra.mxu0 %v22
  %46 = vmatprep.subr.mxu0 0.0
  %47 = vmatpush1.msra.mxu0 %v24
  %48 = vmatprep.subr.mxu0 0.0
  %49 = vmatpush1.msra.mxu0 %v26
  %50 = vmatprep.subr.mxu0 0.0
  %51 = vmatpush1.msra.mxu0 0.0
  %52 = vmatprep.subr.mxu0 0.0
  %53 = vmatpush1.msra.mxu0 0.0
  %54 = vmatprep.subr.mxu0 0.0
  %55 = vmatpush1.msra.mxu0 0.0
  %56 = vmatprep.subr.mxu0 0.0
  %57 = vmatpush1.msra.mxu0 0.0
  %58 = vmatprep.subr.mxu0 0.0
  %59 = vmatpush1.msra.mxu0 0.0
  %60 = vmatprep.subr.mxu0 0.0
  %61 = vmatpush1.msra.mxu0 0.0
  %62 = vmatprep.subr.mxu0 0.0
  %63 = vmatpush1.msra.mxu0 0.0
  %64 = vmatprep.subr.mxu0 0.0
  %65 = vmatpush1.msra.mxu0 0.0
  %66 = vmatprep.subr.mxu0 0.0
  %67 = vmatpush1.msra.mxu0 0.0
  %68 = vmatprep.subr.mxu0 0.0
  %69 = vmatpush1.msra.mxu0 0.0
  %70 = vmatprep.subr.mxu0 0.0
  %71 = vmatpush1.msra.mxu0 0.0
  %72 = vmatprep.subr.mxu0 0.0
  %73 = vmatpush1.msra.mxu0 0.0
  %74 = vmatprep.subr.mxu0 0.0
  %75 = vmatpush1.msra.mxu0 0.0
  %76 = vmatprep.subr.mxu0 0.0
  %77 = vmatpush1.msra.mxu0 0.0
  %78 = vmatprep.subr.mxu0 0.0
  %79 = vmatpush1.msra.mxu0 0.0
  %80 = vmatprep.subr.mxu0 0.0
  %81 = vmatpush1.msra.mxu0 0.0
  %82 = vmatprep.subr.mxu0 0.0
  %83 = vmatpush1.msra.mxu0 0.0
  %84 = vmatprep.subr.mxu0 0.0
  %85 = vmatpush1.msra.mxu0 0.0
  %86 = vmatprep.subr.mxu0 0.0
  %87 = vmatpush1.msra.mxu0 0.0
  %88 = vmatprep.subr.mxu0 0.0
  %89 = vmatpush1.msra.mxu0 0.0
  %90 = vmatprep.subr.mxu0 0.0
  %91 = vmatpush1.msra.mxu0 0.0
  %92 = vmatprep.subr.mxu0 0.0
  %93 = vmatpush1.msra.mxu0 0.0
  %94 = vmatprep.subr.mxu0 0.0
  %95 = vmatpush1.msra.mxu0 0.0
  %96 = vmatprep.subr.mxu0 0.0
  %97 = vmatpush1.msra.mxu0 0.0
  %98 = vmatprep.subr.mxu0 0.0
  %99 = vmatpush1.msra.mxu0 0.0
  %100 = vmatprep.subr.mxu0 0.0
  %101 = vmatpush1.msra.mxu0 0.0
  %102 = vmatprep.subr.mxu0 0.0
  %103 = vmatpush1.msra.mxu0 0.0
  %104 = vmatprep.subr.mxu0 0.0
  %105 = vmatpush1.msra.mxu0 0.0
  %106 = vmatprep.mubr.f32.mxu0 0.0
  %107 = vmatmul.mubr.f32.gmra.mrb[0].mxu0 %v37
  %v108 = vpop.f32.mrb[0].mxu0
  %v109 = vadd.f32 %v34, %v108
  %v110 = vpop.f32.mrb[0].mxu0
  %111 = vmatprep.mubr.f32.mxu0 0.0
  %112 = vmatmul.mubr.f32.gmra.mrb[0].mxu0 %v40
  %v113 = vpop.f32.mrb[0].mxu0
  %v114 = vadd.f32 %v34, %v113
  %v115 = vpop.f32.mrb[0].mxu0
  %116 = vdwg.mxu0
  %v117 = vtanh.pop %v109
  %v118 = vtanh.pop %v114
  %v120 = vrot.slane %v28, 3
  %v121 = vsel %vm35, %v120, 0
  %v124 = vsel %vm35, %v117, 0
  %v127 = vsel %vm35, %v118, 0
  %129 = vmatprep.subr.mxu0 0.0
  %130 = vmatpush1.xpose.msra.mxu0 %v124
  %131 = vmatprep.subr.mxu0 0.0
  %132 = vmatpush1.xpose.msra.mxu0 %v127
  %133 = vmatprep.subr.mxu0 0.0
  %134 = vmatpush1.xpose.msra.mxu0 0.0
  %135 = vmatprep.subr.mxu0 0.0
  %136 = vmatpush1.xpose.msra.mxu0 0.0
  %137 = vmatprep.subr.mxu0 0.0
  %138 = vmatpush1.xpose.msra.mxu0 0.0
  %139 = vmatprep.subr.mxu0 0.0
  %140 = vmatpush1.xpose.msra.mxu0 0.0
  %141 = vmatprep.subr.mxu0 0.0
  %142 = vmatpush1.xpose.msra.mxu0 0.0
  %143 = vmatprep.subr.mxu0 0.0
  %144 = vmatpush1.xpose.msra.mxu0 0.0
  %145 = vmatprep.subr.mxu0 0.0
  %146 = vmatpush1.xpose.msra.mxu0 0.0
  %147 = vmatprep.subr.mxu0 0.0
  %148 = vmatpush1.xpose.msra.mxu0 0.0
  %149 = vmatprep.subr.mxu0 0.0
  %150 = vmatpush1.xpose.msra.mxu0 0.0
  %151 = vmatprep.subr.mxu0 0.0
  %152 = vmatpush1.xpose.msra.mxu0 0.0
  %153 = vmatprep.subr.mxu0 0.0
  %154 = vmatpush1.xpose.msra.mxu0 0.0
  %155 = vmatprep.subr.mxu0 0.0
  %156 = vmatpush1.xpose.msra.mxu0 0.0
  %157 = vmatprep.subr.mxu0 0.0
  %158 = vmatpush1.xpose.msra.mxu0 0.0
  %159 = vmatprep.subr.mxu0 0.0
  %160 = vmatpush1.xpose.msra.mxu0 0.0
  %161 = vmatprep.subr.mxu0 0.0
  %162 = vmatpush1.xpose.msra.mxu0 0.0
  %163 = vmatprep.subr.mxu0 0.0
  %164 = vmatpush1.xpose.msra.mxu0 0.0
  %165 = vmatprep.subr.mxu0 0.0
  %166 = vmatpush1.xpose.msra.mxu0 0.0
  %167 = vmatprep.subr.mxu0 0.0
  %168 = vmatpush1.xpose.msra.mxu0 0.0
  %169 = vmatprep.subr.mxu0 0.0
  %170 = vmatpush1.xpose.msra.mxu0 0.0
  %171 = vmatprep.subr.mxu0 0.0
  %172 = vmatpush1.xpose.msra.mxu0 0.0
  %173 = vmatprep.subr.mxu0 0.0
  %174 = vmatpush1.xpose.msra.mxu0 0.0
  %175 = vmatprep.subr.mxu0 0.0
  %176 = vmatpush1.xpose.msra.mxu0 0.0
  %177 = vmatprep.subr.mxu0 0.0
  %178 = vmatpush1.xpose.msra.mxu0 0.0
  %179 = vmatprep.subr.mxu0 0.0
  %180 = vmatpush1.xpose.msra.mxu0 0.0
  %181 = vmatprep.subr.mxu0 0.0
  %182 = vmatpush1.xpose.msra.mxu0 0.0
  %183 = vmatprep.subr.mxu0 0.0
  %184 = vmatpush1.xpose.msra.mxu0 0.0
  %185 = vmatprep.subr.mxu0 0.0
  %186 = vmatpush1.xpose.msra.mxu0 0.0
  %187 = vmatprep.subr.mxu0 0.0
  %188 = vmatpush1.xpose.msra.mxu0 0.0
  %189 = vmatprep.subr.mxu0 0.0
  %190 = vmatpush1.xpose.msra.mxu0 0.0
  %191 = vmatprep.subr.mxu0 0.0
  %192 = vmatpush1.xpose.msra.mxu0 0.0
  %193 = vmatprep.mubr.f32.mxu0 0.0
  %194 = vmatmul.mubr.f32.gmra.mrb[0].mxu0 %v121
  %v195 = vpop.f32.mrb[0].mxu0
  %v196 = vadd.f32 0.0, %v195
  %v197 = vpop.f32.mrb[0].mxu0
  %198 = vdwg.mxu0
  %vm199 = vcmask 57344
  %v200 = vsel %vm199, %v196, -inf
  %201 = vmax.xlane.f32.xlu0 %v200
  %v202 = vpop.xlane.xlu0 %201
  %v203 = vsub.f32 %v196, %v202
  %v204 = vmul.f32 %v203, 1.442695
  %v205 = vpow.pop %v204
  %v206 = vsel %vm199, %v205, 0.0
  %207 = vadd.xlane.f32.xlu0 %v206
  %v208 = vpop.xlane.xlu0 %207
  %v209 = vrcp.pop %v208
  %v210 = vmul.f32 %v205, %v209
  %vm211 = vcmask 64512
  %v213 = vsel %vm211, %v210, 0
  %215 = vmatprep.subr.mxu0 0.0
  %216 = vmatpush1.msra.mxu0 %v117
  %217 = vmatprep.subr.mxu0 0.0
  %218 = vmatpush1.msra.mxu0 0.0
  %219 = vmatprep.subr.mxu0 0.0
  %220 = vmatpush1.msra.mxu0 0.0
  %221 = vmatprep.subr.mxu0 0.0
  %222 = vmatpush1.msra.mxu0 0.0
  %223 = vmatprep.subr.mxu0 0.0
  %224 = vmatpush1.msra.mxu0 0.0
  %225 = vmatprep.subr.mxu0 0.0
  %226 = vmatpush1.msra.mxu0 0.0
  %227 = vmatprep.subr.mxu0 0.0
  %228 = vmatpush1.msra.mxu0 0.0
  %229 = vmatprep.subr.mxu0 0.0
  %230 = vmatpush1.msra.mxu0 0.0
  %231 = vmatprep.subr.mxu0 0.0
  %232 = vmatpush1.msra.mxu0 0.0
  %233 = vmatprep.subr.mxu0 0.0
  %234 = vmatpush1.msra.mxu0 0.0
  %235 = vmatprep.subr.mxu0 0.0
  %236 = vmatpush1.msra.mxu0 0.0
  %237 = vmatprep.subr.mxu0 0.0
  %238 = vmatpush1.msra.mxu0 0.0
  %239 = vmatprep.subr.mxu0 0.0
  %240 = vmatpush1.msra.mxu0 0.0
  %241 = vmatprep.subr.mxu0 0.0
  %242 = vmatpush1.msra.mxu0 0.0
  %243 = vmatprep.subr.mxu0 0.0
  %244 = vmatpush1.msra.mxu0 0.0
  %245 = vmatprep.subr.mxu0 0.0
  %246 = vmatpush1.msra.mxu0 0.0
  %247 = vmatprep.subr.mxu0 0.0
  %248 = vmatpush1.msra.mxu0 0.0
  %249 = vmatprep.subr.mxu0 0.0
  %250 = vmatpush1.msra.mxu0 0.0
  %251 = vmatprep.subr.mxu0 0.0
  %252 = vmatpush1.msra.mxu0 0.0
  %253 = vmatprep.subr.mxu0 0.0
  %254 = vmatpush1.msra.mxu0 0.0
  %255 = vmatprep.subr.mxu0 0.0
  %256 = vmatpush1.msra.mxu0 0.0
  %257 = vmatprep.subr.mxu0 0.0
  %258 = vmatpush1.msra.mxu0 0.0
  %259 = vmatprep.subr.mxu0 0.0
  %260 = vmatpush1.msra.mxu0 0.0
  %261 = vmatprep.subr.mxu0 0.0
  %262 = vmatpush1.msra.mxu0 0.0
  %263 = vmatprep.subr.mxu0 0.0
  %264 = vmatpush1.msra.mxu0 0.0
  %265 = vmatprep.subr.mxu0 0.0
  %266 = vmatpush1.msra.mxu0 0.0
  %267 = vmatprep.subr.mxu0 0.0
  %268 = vmatpush1.msra.mxu0 0.0
  %269 = vmatprep.subr.mxu0 0.0
  %270 = vmatpush1.msra.mxu0 0.0
  %271 = vmatprep.subr.mxu0 0.0
  %272 = vmatpush1.msra.mxu0 0.0
  %273 = vmatprep.subr.mxu0 0.0
  %274 = vmatpush1.msra.mxu0 0.0
  %275 = vmatprep.subr.mxu0 0.0
  %276 = vmatpush1.msra.mxu0 0.0
  %277 = vmatprep.subr.mxu0 0.0
  %278 = vmatpush1.msra.mxu0 0.0
  %279 = vmatprep.mubr.f32.mxu0 0.0
  %280 = vmatmul.mubr.f32.gmra.mrb[0].mxu0 %v213
  %v281 = vpop.f32.mrb[0].mxu0
  %v282 = vadd.f32 0.0, %v281
  %v283 = vpop.f32.mrb[0].mxu0
  %284 = vdwg.mxu0
  %vm285 = vcmask 122944
  %v286 = vsel %vm285, %v196, -inf
  %287 = vmax.xlane.f32.xlu0 %v286
  %v288 = vpop.xlane.xlu0 %287
  %v289 = vsub.f32 %v196, %v288
  %v290 = vmul.f32 %v289, 1.442695
  %v291 = vpow.pop %v290
  %293 = vrot.lane.b32.xlu0 %v291, 120
  %v294 = vpop.permute.xlu0 %293
  %v296 = vsel %vm199, %v294, 0.0
  %297 = vadd.xlane.f32.xlu0 %v296
  %v298 = vpop.xlane.xlu0 %297
  %v299 = vrcp.pop %v298
  %v300 = vmul.f32 %v291, %v299
  %302 = vrot.lane.b32.xlu0 %v300, 120
  %v303 = vpop.permute.xlu0 %302
  %v304 = vsel %vm211, %v303, 0
  %306 = vmatprep.subr.mxu0 0.0
  %307 = vmatpush1.msra.mxu0 %v118
  %308 = vmatprep.subr.mxu0 0.0
  %309 = vmatpush1.msra.mxu0 0.0
  %310 = vmatprep.subr.mxu0 0.0
  %311 = vmatpush1.msra.mxu0 0.0
  %312 = vmatprep.subr.mxu0 0.0
  %313 = vmatpush1.msra.mxu0 0.0
  %314 = vmatprep.subr.mxu0 0.0
  %315 = vmatpush1.msra.mxu0 0.0
  %316 = vmatprep.subr.mxu0 0.0
  %317 = vmatpush1.msra.mxu0 0.0
  %318 = vmatprep.subr.mxu0 0.0
  %319 = vmatpush1.msra.mxu0 0.0
  %320 = vmatprep.subr.mxu0 0.0
  %321 = vmatpush1.msra.mxu0 0.0
  %322 = vmatprep.subr.mxu0 0.0
  %323 = vmatpush1.msra.mxu0 0.0
  %324 = vmatprep.subr.mxu0 0.0
  %325 = vmatpush1.msra.mxu0 0.0
  %326 = vmatprep.subr.mxu0 0.0
  %327 = vmatpush1.msra.mxu0 0.0
  %328 = vmatprep.subr.mxu0 0.0
  %329 = vmatpush1.msra.mxu0 0.0
  %330 = vmatprep.subr.mxu0 0.0
  %331 = vmatpush1.msra.mxu0 0.0
  %332 = vmatprep.subr.mxu0 0.0
  %333 = vmatpush1.msra.mxu0 0.0
  %334 = vmatprep.subr.mxu0 0.0
  %335 = vmatpush1.msra.mxu0 0.0
  %336 = vmatprep.subr.mxu0 0.0
  %337 = vmatpush1.msra.mxu0 0.0
  %338 = vmatprep.subr.mxu0 0.0
  %339 = vmatpush1.msra.mxu0 0.0
  %340 = vmatprep.subr.mxu0 0.0
  %341 = vmatpush1.msra.mxu0 0.0
  %342 = vmatprep.subr.mxu0 0.0
  %343 = vmatpush1.msra.mxu0 0.0
  %344 = vmatprep.subr.mxu0 0.0
  %345 = vmatpush1.msra.mxu0 0.0
  %346 = vmatprep.subr.mxu0 0.0
  %347 = vmatpush1.msra.mxu0 0.0
  %348 = vmatprep.subr.mxu0 0.0
  %349 = vmatpush1.msra.mxu0 0.0
  %350 = vmatprep.subr.mxu0 0.0
  %351 = vmatpush1.msra.mxu0 0.0
  %352 = vmatprep.subr.mxu0 0.0
  %353 = vmatpush1.msra.mxu0 0.0
  %354 = vmatprep.subr.mxu0 0.0
  %355 = vmatpush1.msra.mxu0 0.0
  %356 = vmatprep.subr.mxu0 0.0
  %357 = vmatpush1.msra.mxu0 0.0
  %358 = vmatprep.subr.mxu0 0.0
  %359 = vmatpush1.msra.mxu0 0.0
  %360 = vmatprep.subr.mxu0 0.0
  %361 = vmatpush1.msra.mxu0 0.0
  %362 = vmatprep.subr.mxu0 0.0
  %363 = vmatpush1.msra.mxu0 0.0
  %364 = vmatprep.subr.mxu0 0.0
  %365 = vmatpush1.msra.mxu0 0.0
  %366 = vmatprep.subr.mxu0 0.0
  %367 = vmatpush1.msra.mxu0 0.0
  %368 = vmatprep.subr.mxu0 0.0
  %369 = vmatpush1.msra.mxu0 0.0
  %370 = vmatprep.mubr.f32.mxu0 0.0
  %371 = vmatmul.mubr.f32.gmra.mrb[0].mxu0 %v304
  %v372 = vpop.f32.mrb[0].mxu0
  %v373 = vadd.f32 0.0, %v372
  %v374 = vpop.f32.mrb[0].mxu0
  %375 = vdwg.mxu0
  %v377 = vrot.slane %v373, 7
  %vm379 = vcmask 1040384
  %v380 = vsel %vm379, %v282, %v377
  %v382 = vsel %vm35, %v380, 0
  %384 = vmatprep.subr.mxu0 0.0
  %385 = vmatpush1.msra.mxu0 %v21
  %386 = vmatprep.subr.mxu0 0.0
  %387 = vmatpush1.msra.mxu0 %v23
  %388 = vmatprep.subr.mxu0 0.0
  %389 = vmatpush1.msra.mxu0 %v25
  %390 = vmatprep.subr.mxu0 0.0
  %391 = vmatpush1.msra.mxu0 %v27
  %392 = vmatprep.subr.mxu0 0.0
  %393 = vmatpush1.msra.mxu0 0.0
  %394 = vmatprep.subr.mxu0 0.0
  %395 = vmatpush1.msra.mxu0 0.0
  %396 = vmatprep.subr.mxu0 0.0
  %397 = vmatpush1.msra.mxu0 0.0
  %398 = vmatprep.subr.mxu0 0.0
  %399 = vmatpush1.msra.mxu0 0.0
  %400 = vmatprep.subr.mxu0 0.0
  %401 = vmatpush1.msra.mxu0 0.0
  %402 = vmatprep.subr.mxu0 0.0
  %403 = vmatpush1.msra.mxu0 0.0
  %404 = vmatprep.subr.mxu0 0.0
  %405 = vmatpush1.msra.mxu0 0.0
  %406 = vmatprep.subr.mxu0 0.0
  %407 = vmatpush1.msra.mxu0 0.0
  %408 = vmatprep.subr.mxu0 0.0
  %409 = vmatpush1.msra.mxu0 0.0
  %410 = vmatprep.subr.mxu0 0.0
  %411 = vmatpush1.msra.mxu0 0.0
  %412 = vmatprep.subr.mxu0 0.0
  %413 = vmatpush1.msra.mxu0 0.0
  %414 = vmatprep.subr.mxu0 0.0
  %415 = vmatpush1.msra.mxu0 0.0
  %416 = vmatprep.subr.mxu0 0.0
  %417 = vmatpush1.msra.mxu0 0.0
  %418 = vmatprep.subr.mxu0 0.0
  %419 = vmatpush1.msra.mxu0 0.0
  %420 = vmatprep.subr.mxu0 0.0
  %421 = vmatpush1.msra.mxu0 0.0
  %422 = vmatprep.subr.mxu0 0.0
  %423 = vmatpush1.msra.mxu0 0.0
  %424 = vmatprep.subr.mxu0 0.0
  %425 = vmatpush1.msra.mxu0 0.0
  %426 = vmatprep.subr.mxu0 0.0
  %427 = vmatpush1.msra.mxu0 0.0
  %428 = vmatprep.subr.mxu0 0.0
  %429 = vmatpush1.msra.mxu0 0.0
  %430 = vmatprep.subr.mxu0 0.0
  %431 = vmatpush1.msra.mxu0 0.0
  %432 = vmatprep.subr.mxu0 0.0
  %433 = vmatpush1.msra.mxu0 0.0
  %434 = vmatprep.subr.mxu0 0.0
  %435 = vmatpush1.msra.mxu0 0.0
  %436 = vmatprep.subr.mxu0 0.0
  %437 = vmatpush1.msra.mxu0 0.0
  %438 = vmatprep.subr.mxu0 0.0
  %439 = vmatpush1.msra.mxu0 0.0
  %440 = vmatprep.subr.mxu0 0.0
  %441 = vmatpush1.msra.mxu0 0.0
  %442 = vmatprep.subr.mxu0 0.0
  %443 = vmatpush1.msra.mxu0 0.0
  %444 = vmatprep.subr.mxu0 0.0
  %445 = vmatpush1.msra.mxu0 0.0
  %446 = vmatprep.subr.mxu0 0.0
  %447 = vmatpush1.msra.mxu0 0.0
  %448 = vmatprep.mubr.f32.mxu0 0.0
  %449 = vmatmul.mubr.f32.gmra.mrb[0].mxu0 %v382
  %v450 = vpop.f32.mrb[0].mxu0
  %v451 = vadd.f32 0.0, %v450
  %v452 = vpop.f32.mrb[0].mxu0
  %453 = vdwg.mxu0
  %v454 = vlaneseq
  %v455 = vshrl.u32 %v454, 7
  %v456 = vsub.s32 1, %v455
  %v457 = vrot.slane %v28, %v456
  %v458 = vadd.f32 %v451, %v457
  %v459 = vlaneseq
  %v460 = vshrl.u32 %v459, 7
  %v461 = vsub.s32 0, %v460
  %v462 = vrot.slane %v451, %v461
  %v463 = vlaneseq
  %v464 = vshrl.u32 %v463, 7
  %v465 = vsub.s32 1, %v464
  %v466 = vrot.slane %v451, %v465
  %v469 = vld [vmem:[%s1] sm:$0xff]
  %v470 = vld [vmem:[%s1 + $0x8] sm:$0xff]
  %v471 = vld [vmem:[%s1 + $0x10] sm:$0xff]
  %v472 = vld [vmem:[%s1 + $0x18] sm:$0xff]
  %477 = vrot.lane.b32.xlu0 %v20, 96
  %v478 = vpop.permute.xlu0 %477
  %479 = vrot.lane.b32.xlu0 %v22, 96
  %v480 = vpop.permute.xlu0 %479
  %481 = vrot.lane.b32.xlu0 %v24, 96
  %v482 = vpop.permute.xlu0 %481
  %483 = vrot.lane.b32.xlu0 %v26, 96
  %v484 = vpop.permute.xlu0 %483
  %v490 = vsel %vm35, %v469, 0
  %v493 = vsel %vm35, %v470, 0
  %v496 = vsel %vm35, %v471, 0
  %v499 = vsel %vm35, %v472, 0
  %501 = vmatprep.subr.mxu0 0.0
  %502 = vmatpush1.msra.mxu0 %v478
  %503 = vmatprep.subr.mxu0 0.0
  %504 = vmatpush1.msra.mxu0 %v480
  %505 = vmatprep.subr.mxu0 0.0
  %506 = vmatpush1.msra.mxu0 %v482
  %507 = vmatprep.subr.mxu0 0.0
  %508 = vmatpush1.msra.mxu0 %v484
  %509 = vmatprep.subr.mxu0 0.0
  %510 = vmatpush1.msra.mxu0 0.0
  %511 = vmatprep.subr.mxu0 0.0
  %512 = vmatpush1.msra.mxu0 0.0
  %513 = vmatprep.subr.mxu0 0.0
  %514 = vmatpush1.msra.mxu0 0.0
  %515 = vmatprep.subr.mxu0 0.0
  %516 = vmatpush1.msra.mxu0 0.0
  %517 = vmatprep.subr.mxu0 0.0
  %518 = vmatpush1.msra.mxu0 0.0
  %519 = vmatprep.subr.mxu0 0.0
  %520 = vmatpush1.msra.mxu0 0.0
  %521 = vmatprep.subr.mxu0 0.0
  %522 = vmatpush1.msra.mxu0 0.0
  %523 = vmatprep.subr.mxu0 0.0
  %524 = vmatpush1.msra.mxu0 0.0
  %525 = vmatprep.subr.mxu0 0.0
  %526 = vmatpush1.msra.mxu0 0.0
  %527 = vmatprep.subr.mxu0 0.0
  %528 = vmatpush1.msra.mxu0 0.0
  %529 = vmatprep.subr.mxu0 0.0
  %530 = vmatpush1.msra.mxu0 0.0
  %531 = vmatprep.subr.mxu0 0.0
  %532 = vmatpush1.msra.mxu0 0.0
  %533 = vmatprep.subr.mxu0 0.0
  %534 = vmatpush1.msra.mxu0 0.0
  %535 = vmatprep.subr.mxu0 0.0
  %536 = vmatpush1.msra.mxu0 0.0
  %537 = vmatprep.subr.mxu0 0.0
  %538 = vmatpush1.msra.mxu0 0.0
  %539 = vmatprep.subr.mxu0 0.0
  %540 = vmatpush1.msra.mxu0 0.0
  %541 = vmatprep.subr.mxu0 0.0
  %542 = vmatpush1.msra.mxu0 0.0
  %543 = vmatprep.subr.mxu0 0.0
  %544 = vmatpush1.msra.mxu0 0.0
  %545 = vmatprep.subr.mxu0 0.0
  %546 = vmatpush1.msra.mxu0 0.0
  %547 = vmatprep.subr.mxu0 0.0
  %548 = vmatpush1.msra.mxu0 0.0
  %549 = vmatprep.subr.mxu0 0.0
  %550 = vmatpush1.msra.mxu0 0.0
  %551 = vmatprep.subr.mxu0 0.0
  %552 = vmatpush1.msra.mxu0 0.0
  %553 = vmatprep.subr.mxu0 0.0
  %554 = vmatpush1.msra.mxu0 0.0
  %555 = vmatprep.subr.mxu0 0.0
  %556 = vmatpush1.msra.mxu0 0.0
  %557 = vmatprep.subr.mxu0 0.0
  %558 = vmatpush1.msra.mxu0 0.0
  %559 = vmatprep.subr.mxu0 0.0
  %560 = vmatpush1.msra.mxu0 0.0
  %561 = vmatprep.subr.mxu0 0.0
  %562 = vmatpush1.msra.mxu0 0.0
  %563 = vmatprep.subr.mxu0 0.0
  %564 = vmatpush1.msra.mxu0 0.0
  %565 = vmatprep.mubr.f32.mxu0 0.0
  %566 = vmatmul.mubr.f32.gmra.mrb[0].mxu0 %v490
  %v567 = vpop.f32.mrb[0].mxu0
  %v568 = vadd.f32 0.0, %v567
  %v569 = vpop.f32.mrb[0].mxu0
  %570 = vmatprep.mubr.f32.mxu0 0.0
  %571 = vmatmul.mubr.f32.gmra.mrb[0].mxu0 %v493
  %v572 = vpop.f32.mrb[0].mxu0
  %v573 = vadd.f32 0.0, %v572
  %v574 = vpop.f32.mrb[0].mxu0
  %575 = vmatprep.mubr.f32.mxu0 0.0
  %576 = vmatmul.mubr.f32.gmra.mrb[0].mxu0 %v496
  %v577 = vpop.f32.mrb[0].mxu0
  %v578 = vadd.f32 0.0, %v577
  %v579 = vpop.f32.mrb[0].mxu0
  %580 = vmatprep.mubr.f32.mxu0 0.0
  %581 = vmatmul.mubr.f32.gmra.mrb[0].mxu0 %v499
  %v582 = vpop.f32.mrb[0].mxu0
  %v583 = vadd.f32 0.0, %v582
  %v584 = vpop.f32.mrb[0].mxu0
  %585 = vdwg.mxu0
  %v587 = vsel %vm35, %v568, 0
  %v590 = vsel %vm35, %v573, 0
  %v593 = vsel %vm35, %v578, 0
  %v596 = vsel %vm35, %v583, 0
  %598 = vmatprep.subr.mxu0 0.0
  %599 = vmatpush1.xpose.msra.mxu0 %v587
  %600 = vmatprep.subr.mxu0 0.0
  %601 = vmatpush1.xpose.msra.mxu0 %v590
  %602 = vmatprep.subr.mxu0 0.0
  %603 = vmatpush1.xpose.msra.mxu0 %v593
  %604 = vmatprep.subr.mxu0 0.0
  %605 = vmatpush1.xpose.msra.mxu0 %v596
  %606 = vmatprep.subr.mxu0 0.0
  %607 = vmatpush1.xpose.msra.mxu0 0.0
  %608 = vmatprep.subr.mxu0 0.0
  %609 = vmatpush1.xpose.msra.mxu0 0.0
  %610 = vmatprep.subr.mxu0 0.0
  %611 = vmatpush1.xpose.msra.mxu0 0.0
  %612 = vmatprep.subr.mxu0 0.0
  %613 = vmatpush1.xpose.msra.mxu0 0.0
  %614 = vmatprep.subr.mxu0 0.0
  %615 = vmatpush1.xpose.msra.mxu0 0.0
  %616 = vmatprep.subr.mxu0 0.0
  %617 = vmatpush1.xpose.msra.mxu0 0.0
  %618 = vmatprep.subr.mxu0 0.0
  %619 = vmatpush1.xpose.msra.mxu0 0.0
  %620 = vmatprep.subr.mxu0 0.0
  %621 = vmatpush1.xpose.msra.mxu0 0.0
  %622 = vmatprep.subr.mxu0 0.0
  %623 = vmatpush1.xpose.msra.mxu0 0.0
  %624 = vmatprep.subr.mxu0 0.0
  %625 = vmatpush1.xpose.msra.mxu0 0.0
  %626 = vmatprep.subr.mxu0 0.0
  %627 = vmatpush1.xpose.msra.mxu0 0.0
  %628 = vmatprep.subr.mxu0 0.0
  %629 = vmatpush1.xpose.msra.mxu0 0.0
  %630 = vmatprep.subr.mxu0 0.0
  %631 = vmatpush1.xpose.msra.mxu0 0.0
  %632 = vmatprep.subr.mxu0 0.0
  %633 = vmatpush1.xpose.msra.mxu0 0.0
  %634 = vmatprep.subr.mxu0 0.0
  %635 = vmatpush1.xpose.msra.mxu0 0.0
  %636 = vmatprep.subr.mxu0 0.0
  %637 = vmatpush1.xpose.msra.mxu0 0.0
  %638 = vmatprep.subr.mxu0 0.0
  %639 = vmatpush1.xpose.msra.mxu0 0.0
  %640 = vmatprep.subr.mxu0 0.0
  %641 = vmatpush1.xpose.msra.mxu0 0.0
  %642 = vmatprep.subr.mxu0 0.0
  %643 = vmatpush1.xpose.msra.mxu0 0.0
  %644 = vmatprep.subr.mxu0 0.0
  %645 = vmatpush1.xpose.msra.mxu0 0.0
  %646 = vmatprep.subr.mxu0 0.0
  %647 = vmatpush1.xpose.msra.mxu0 0.0
  %648 = vmatprep.subr.mxu0 0.0
  %649 = vmatpush1.xpose.msra.mxu0 0.0
  %650 = vmatprep.subr.mxu0 0.0
  %651 = vmatpush1.xpose.msra.mxu0 0.0
  %652 = vmatprep.subr.mxu0 0.0
  %653 = vmatpush1.xpose.msra.mxu0 0.0
  %654 = vmatprep.subr.mxu0 0.0
  %655 = vmatpush1.xpose.msra.mxu0 0.0
  %656 = vmatprep.subr.mxu0 0.0
  %657 = vmatpush1.xpose.msra.mxu0 0.0
  %658 = vmatprep.subr.mxu0 0.0
  %659 = vmatpush1.xpose.msra.mxu0 0.0
  %660 = vmatprep.subr.mxu0 0.0
  %661 = vmatpush1.xpose.msra.mxu0 0.0
  %662 = vmatprep.mubr.f32.mxu0 0.0
  %663 = vmatmul.mubr.f32.gmra.mrb[0].mxu0 %v587
  %v664 = vpop.f32.mrb[0].mxu0
  %v665 = vadd.f32 0.0, %v664
  %v666 = vpop.f32.mrb[0].mxu0
  %667 = vmatprep.mubr.f32.mxu0 0.0
  %668 = vmatmul.mubr.f32.gmra.mrb[0].mxu0 %v590
  %v669 = vpop.f32.mrb[0].mxu0
  %v670 = vadd.f32 0.0, %v669
  %v671 = vpop.f32.mrb[0].mxu0
  %672 = vmatprep.mubr.f32.mxu0 0.0
  %673 = vmatmul.mubr.f32.gmra.mrb[0].mxu0 %v593
  %v674 = vpop.f32.mrb[0].mxu0
  %v675 = vadd.f32 0.0, %v674
  %v676 = vpop.f32.mrb[0].mxu0
  %677 = vmatprep.mubr.f32.mxu0 0.0
  %678 = vmatmul.mubr.f32.gmra.mrb[0].mxu0 %v596
  %v679 = vpop.f32.mrb[0].mxu0
  %v680 = vadd.f32 0.0, %v679
  %v681 = vpop.f32.mrb[0].mxu0
  %682 = vdwg.mxu0
  %v683 = vmul.f32 %v665, 0.17677669
  %v684 = vmul.f32 %v670, 0.17677669
  %v685 = vmul.f32 %v675, 0.17677669
  %v686 = vmul.f32 %v680, 0.17677669
  %v687 = vld [vmem:[%s2] sm:$0xff]
  %v688 = vld [vmem:[%s2 + $0x8] sm:$0xff]
  %v689 = vld [vmem:[%s2 + $0x10] sm:$0xff]
  %v690 = vld [vmem:[%s2 + $0x18] sm:$0xff]
  %v691 = vadd.f32 %v683, %v687
  %v692 = vadd.f32 %v684, %v688
  %v693 = vadd.f32 %v685, %v689
  %v694 = vadd.f32 %v686, %v690
  %v695 = vsel %vm35, %v691, -inf
  %696 = vmax.xlane.f32.xlu0 %v695
  %v697 = vpop.xlane.xlu0 %696
  %v698 = vsel %vm35, %v692, -inf
  %699 = vmax.xlane.f32.xlu0 %v698
  %v700 = vpop.xlane.xlu0 %699
  %v701 = vsel %vm35, %v693, -inf
  %702 = vmax.xlane.f32.xlu0 %v701
  %v703 = vpop.xlane.xlu0 %702
  %v704 = vsel %vm35, %v694, -inf
  %705 = vmax.xlane.f32.xlu0 %v704
  %v706 = vpop.xlane.xlu0 %705
  %v707 = vsub.f32 %v691, %v697
  %v708 = vsub.f32 %v692, %v700
  %v709 = vsub.f32 %v693, %v703
  %v710 = vsub.f32 %v694, %v706
  %v711 = vmul.f32 %v707, 1.442695
  %v712 = vpow.pop %v711
  %v713 = vmul.f32 %v708, 1.442695
  %v714 = vpow.pop %v713
  %v715 = vmul.f32 %v709, 1.442695
  %v716 = vpow.pop %v715
  %v717 = vmul.f32 %v710, 1.442695
  %v718 = vpow.pop %v717
  %v719 = vsel %vm35, %v712, 0.0
  %720 = vadd.xlane.f32.xlu0 %v719
  %v721 = vpop.xlane.xlu0 %720
  %v722 = vsel %vm35, %v714, 0.0
  %723 = vadd.xlane.f32.xlu0 %v722
  %v724 = vpop.xlane.xlu0 %723
  %v725 = vsel %vm35, %v716, 0.0
  %726 = vadd.xlane.f32.xlu0 %v725
  %v727 = vpop.xlane.xlu0 %726
  %v728 = vsel %vm35, %v718, 0.0
  %729 = vadd.xlane.f32.xlu0 %v728
  %v730 = vpop.xlane.xlu0 %729
  %v731 = vrcp.pop %v721
  %v732 = vmul.f32 %v712, %v731
  %v733 = vrcp.pop %v724
  %v734 = vmul.f32 %v714, %v733
  %v735 = vrcp.pop %v727
  %v736 = vmul.f32 %v716, %v735
  %v737 = vrcp.pop %v730
  %v738 = vmul.f32 %v718, %v737
  %739 = vrot.lane.b32.xlu0 %v462, 125
  %v740 = vpop.permute.xlu0 %739
  %741 = vrot.lane.b32.xlu0 %v466, 125
  %v742 = vpop.permute.xlu0 %741
  %v746 = vsel %vm35, %v732, 0
  %v749 = vsel %vm35, %v734, 0
  %v752 = vsel %vm35, %v736, 0
  %v755 = vsel %vm35, %v738, 0
  %757 = vmatprep.subr.mxu0 0.0
  %758 = vmatpush1.msra.mxu0 %v568
  %759 = vmatprep.subr.mxu0 0.0
  %760 = vmatpush1.msra.mxu0 %v573
  %761 = vmatprep.subr.mxu0 0.0
  %762 = vmatpush1.msra.mxu0 %v578
  %763 = vmatprep.subr.mxu0 0.0
  %764 = vmatpush1.msra.mxu0 %v583
  %765 = vmatprep.subr.mxu0 0.0
  %766 = vmatpush1.msra.mxu0 0.0
  %767 = vmatprep.subr.mxu0 0.0
  %768 = vmatpush1.msra.mxu0 0.0
  %769 = vmatprep.subr.mxu0 0.0
  %770 = vmatpush1.msra.mxu0 0.0
  %771 = vmatprep.subr.mxu0 0.0
  %772 = vmatpush1.msra.mxu0 0.0
  %773 = vmatprep.subr.mxu0 0.0
  %774 = vmatpush1.msra.mxu0 0.0
  %775 = vmatprep.subr.mxu0 0.0
  %776 = vmatpush1.msra.mxu0 0.0
  %777 = vmatprep.subr.mxu0 0.0
  %778 = vmatpush1.msra.mxu0 0.0
  %779 = vmatprep.subr.mxu0 0.0
  %780 = vmatpush1.msra.mxu0 0.0
  %781 = vmatprep.subr.mxu0 0.0
  %782 = vmatpush1.msra.mxu0 0.0
  %783 = vmatprep.subr.mxu0 0.0
  %784 = vmatpush1.msra.mxu0 0.0
  %785 = vmatprep.subr.mxu0 0.0
  %786 = vmatpush1.msra.mxu0 0.0
  %787 = vmatprep.subr.mxu0 0.0
  %788 = vmatpush1.msra.mxu0 0.0
  %789 = vmatprep.subr.mxu0 0.0
  %790 = vmatpush1.msra.mxu0 0.0
  %791 = vmatprep.subr.mxu0 0.0
  %792 = vmatpush1.msra.mxu0 0.0
  %793 = vmatprep.subr.mxu0 0.0
  %794 = vmatpush1.msra.mxu0 0.0
  %795 = vmatprep.subr.mxu0 0.0
  %796 = vmatpush1.msra.mxu0 0.0
  %797 = vmatprep.subr.mxu0 0.0
  %798 = vmatpush1.msra.mxu0 0.0
  %799 = vmatprep.subr.mxu0 0.0
  %800 = vmatpush1.msra.mxu0 0.0
  %801 = vmatprep.subr.mxu0 0.0
  %802 = vmatpush1.msra.mxu0 0.0
  %803 = vmatprep.subr.mxu0 0.0
  %804 = vmatpush1.msra.mxu0 0.0
  %805 = vmatprep.subr.mxu0 0.0
  %806 = vmatpush1.msra.mxu0 0.0
  %807 = vmatprep.subr.mxu0 0.0
  %808 = vmatpush1.msra.mxu0 0.0
  %809 = vmatprep.subr.mxu0 0.0
  %810 = vmatpush1.msra.mxu0 0.0
  %811 = vmatprep.subr.mxu0 0.0
  %812 = vmatpush1.msra.mxu0 0.0
  %813 = vmatprep.subr.mxu0 0.0
  %814 = vmatpush1.msra.mxu0 0.0
  %815 = vmatprep.subr.mxu0 0.0
  %816 = vmatpush1.msra.mxu0 0.0
  %817 = vmatprep.subr.mxu0 0.0
  %818 = vmatpush1.msra.mxu0 0.0
  %819 = vmatprep.subr.mxu0 0.0
  %820 = vmatpush1.msra.mxu0 0.0
  %821 = vmatprep.mubr.f32.mxu0 0.0
  %822 = vmatmul.mubr.f32.gmra.mrb[0].mxu0 %v746
  %v823 = vpop.f32.mrb[0].mxu0
  %v824 = vadd.f32 %v740, %v823
  %v825 = vpop.f32.mrb[0].mxu0
  %826 = vmatprep.mubr.f32.mxu0 0.0
  %827 = vmatmul.mubr.f32.gmra.mrb[0].mxu0 %v749
  %v828 = vpop.f32.mrb[0].mxu0
  %v829 = vadd.f32 %v740, %v828
  %v830 = vpop.f32.mrb[0].mxu0
  %831 = vmatprep.mubr.f32.mxu0 0.0
  %832 = vmatmul.mubr.f32.gmra.mrb[0].mxu0 %v752
  %v833 = vpop.f32.mrb[0].mxu0
  %v834 = vadd.f32 %v742, %v833
  %v835 = vpop.f32.mrb[0].mxu0
  %836 = vmatprep.mubr.f32.mxu0 0.0
  %837 = vmatmul.mubr.f32.gmra.mrb[0].mxu0 %v755
  %v838 = vpop.f32.mrb[0].mxu0
  %v839 = vadd.f32 %v742, %v838
  %v840 = vpop.f32.mrb[0].mxu0
  %841 = vdwg.mxu0
  %v842 = vmax.f32 %v824, 0.0
  %v843 = vmax.f32 %v829, 0.0
  %v844 = vmax.f32 %v834, 0.0
  %v845 = vmax.f32 %v839, 0.0
  %846 = vrot.lane.b32.xlu0 %v20, 64
  %v847 = vpop.permute.xlu0 %846
  %848 = vrot.lane.b32.xlu0 %v22, 64
  %v849 = vpop.permute.xlu0 %848
  %850 = vrot.lane.b32.xlu0 %v24, 64
  %v851 = vpop.permute.xlu0 %850
  %852 = vrot.lane.b32.xlu0 %v26, 64
  %v853 = vpop.permute.xlu0 %852
  %858 = vrot.lane.b32.xlu0 %v462, 93
  %v859 = vpop.permute.xlu0 %858
  %860 = vrot.lane.b32.xlu0 %v466, 93
  %v861 = vpop.permute.xlu0 %860
  %v865 = vsel %vm35, %v842, 0
  %v868 = vsel %vm35, %v843, 0
  %v871 = vsel %vm35, %v844, 0
  %v874 = vsel %vm35, %v845, 0
  %876 = vmatprep.subr.mxu0 0.0
  %877 = vmatpush1.msra.mxu0 %v847
  %878 = vmatprep.subr.mxu0 0.0
  %879 = vmatpush1.msra.mxu0 %v849
  %880 = vmatprep.subr.mxu0 0.0
  %881 = vmatpush1.msra.mxu0 %v851
  %882 = vmatprep.subr.mxu0 0.0
  %883 = vmatpush1.msra.mxu0 %v853
  %884 = vmatprep.subr.mxu0 0.0
  %885 = vmatpush1.msra.mxu0 0.0
  %886 = vmatprep.subr.mxu0 0.0
  %887 = vmatpush1.msra.mxu0 0.0
  %888 = vmatprep.subr.mxu0 0.0
  %889 = vmatpush1.msra.mxu0 0.0
  %890 = vmatprep.subr.mxu0 0.0
  %891 = vmatpush1.msra.mxu0 0.0
  %892 = vmatprep.subr.mxu0 0.0
  %893 = vmatpush1.msra.mxu0 0.0
  %894 = vmatprep.subr.mxu0 0.0
  %895 = vmatpush1.msra.mxu0 0.0
  %896 = vmatprep.subr.mxu0 0.0
  %897 = vmatpush1.msra.mxu0 0.0
  %898 = vmatprep.subr.mxu0 0.0
  %899 = vmatpush1.msra.mxu0 0.0
  %900 = vmatprep.subr.mxu0 0.0
  %901 = vmatpush1.msra.mxu0 0.0
  %902 = vmatprep.subr.mxu0 0.0
  %903 = vmatpush1.msra.mxu0 0.0
  %904 = vmatprep.subr.mxu0 0.0
  %905 = vmatpush1.msra.mxu0 0.0
  %906 = vmatprep.subr.mxu0 0.0
  %907 = vmatpush1.msra.mxu0 0.0
  %908 = vmatprep.subr.mxu0 0.0
  %909 = vmatpush1.msra.mxu0 0.0
  %910 = vmatprep.subr.mxu0 0.0
  %911 = vmatpush1.msra.mxu0 0.0
  %912 = vmatprep.subr.mxu0 0.0
  %913 = vmatpush1.msra.mxu0 0.0
  %914 = vmatprep.subr.mxu0 0.0
  %915 = vmatpush1.msra.mxu0 0.0
  %916 = vmatprep.subr.mxu0 0.0
  %917 = vmatpush1.msra.mxu0 0.0
  %918 = vmatprep.subr.mxu0 0.0
  %919 = vmatpush1.msra.mxu0 0.0
  %920 = vmatprep.subr.mxu0 0.0
  %921 = vmatpush1.msra.mxu0 0.0
  %922 = vmatprep.subr.mxu0 0.0
  %923 = vmatpush1.msra.mxu0 0.0
  %924 = vmatprep.subr.mxu0 0.0
  %925 = vmatpush1.msra.mxu0 0.0
  %926 = vmatprep.subr.mxu0 0.0
  %927 = vmatpush1.msra.mxu0 0.0
  %928 = vmatprep.subr.mxu0 0.0
  %929 = vmatpush1.msra.mxu0 0.0
  %930 = vmatprep.subr.mxu0 0.0
  %931 = vmatpush1.msra.mxu0 0.0
  %932 = vmatprep.subr.mxu0 0.0
  %933 = vmatpush1.msra.mxu0 0.0
  %934 = vmatprep.subr.mxu0 0.0
  %935 = vmatpush1.msra.mxu0 0.0
  %936 = vmatprep.subr.mxu0 0.0
  %937 = vmatpush1.msra.mxu0 0.0
  %938 = vmatprep.subr.mxu0 0.0
  %939 = vmatpush1.msra.mxu0 0.0
  %940 = vmatprep.mubr.f32.mxu0 0.0
  %941 = vmatmul.mubr.f32.gmra.mrb[0].mxu0 %v865
  %v942 = vpop.f32.mrb[0].mxu0
  %v943 = vadd.f32 %v859, %v942
  %v944 = vpop.f32.mrb[0].mxu0
  %945 = vmatprep.mubr.f32.mxu0 0.0
  %946 = vmatmul.mubr.f32.gmra.mrb[0].mxu0 %v868
  %v947 = vpop.f32.mrb[0].mxu0
  %v948 = vadd.f32 %v859, %v947
  %v949 = vpop.f32.mrb[0].mxu0
  %950 = vmatprep.mubr.f32.mxu0 0.0
  %951 = vmatmul.mubr.f32.gmra.mrb[0].mxu0 %v871
  %v952 = vpop.f32.mrb[0].mxu0
  %v953 = vadd.f32 %v861, %v952
  %v954 = vpop.f32.mrb[0].mxu0
  %955 = vmatprep.mubr.f32.mxu0 0.0
  %956 = vmatmul.mubr.f32.gmra.mrb[0].mxu0 %v874
  %v957 = vpop.f32.mrb[0].mxu0
  %v958 = vadd.f32 %v861, %v957
  %v959 = vpop.f32.mrb[0].mxu0
  %960 = vdwg.mxu0
  %v961 = vtanh.pop %v943
  %v962 = vtanh.pop %v948
  %v963 = vtanh.pop %v953
  %v964 = vtanh.pop %v958
  %v965 = vrot.slane %v28, 4
  %v966 = vsel %vm35, %v965, 0
  %v969 = vsel %vm35, %v961, 0
  %v972 = vsel %vm35, %v962, 0
  %v975 = vsel %vm35, %v963, 0
  %v978 = vsel %vm35, %v964, 0
  %980 = vmatprep.subr.mxu0 0.0
  %981 = vmatpush1.xpose.msra.mxu0 %v969
  %982 = vmatprep.subr.mxu0 0.0
  %983 = vmatpush1.xpose.msra.mxu0 %v972
  %984 = vmatprep.subr.mxu0 0.0
  %985 = vmatpush1.xpose.msra.mxu0 %v975
  %986 = vmatprep.subr.mxu0 0.0
  %987 = vmatpush1.xpose.msra.mxu0 %v978
  %988 = vmatprep.subr.mxu0 0.0
  %989 = vmatpush1.xpose.msra.mxu0 0.0
  %990 = vmatprep.subr.mxu0 0.0
  %991 = vmatpush1.xpose.msra.mxu0 0.0
  %992 = vmatprep.subr.mxu0 0.0
  %993 = vmatpush1.xpose.msra.mxu0 0.0
  %994 = vmatprep.subr.mxu0 0.0
  %995 = vmatpush1.xpose.msra.mxu0 0.0
  %996 = vmatprep.subr.mxu0 0.0
  %997 = vmatpush1.xpose.msra.mxu0 0.0
  %998 = vmatprep.subr.mxu0 0.0
  %999 = vmatpush1.xpose.msra.mxu0 0.0
  %1000 = vmatprep.subr.mxu0 0.0
  %1001 = vmatpush1.xpose.msra.mxu0 0.0
  %1002 = vmatprep.subr.mxu0 0.0
  %1003 = vmatpush1.xpose.msra.mxu0 0.0
  %1004 = vmatprep.subr.mxu0 0.0
  %1005 = vmatpush1.xpose.msra.mxu0 0.0
  %1006 = vmatprep.subr.mxu0 0.0
  %1007 = vmatpush1.xpose.msra.mxu0 0.0
  %1008 = vmatprep.subr.mxu0 0.0
  %1009 = vmatpush1.xpose.msra.mxu0 0.0
  %1010 = vmatprep.subr.mxu0 0.0
  %1011 = vmatpush1.xpose.msra.mxu0 0.0
  %1012 = vmatprep.subr.mxu0 0.0
  %1013 = vmatpush1.xpose.msra.mxu0 0.0
  %1014 = vmatprep.subr.mxu0 0.0
  %1015 = vmatpush1.xpose.msra.mxu0 0.0
  %1016 = vmatprep.subr.mxu0 0.0
  %1017 = vmatpush1.xpose.msra.mxu0 0.0
  %1018 = vmatprep.subr.mxu0 0.0
  %1019 = vmatpush1.xpose.msra.mxu0 0.0
  %1020 = vmatprep.subr.mxu0 0.0
  %1021 = vmatpush1.xpose.msra.mxu0 0.0
  %1022 = vmatprep.subr.mxu0 0.0
  %1023 = vmatpush1.xpose.msra.mxu0 0.0
  %1024 = vmatprep.subr.mxu0 0.0
  %1025 = vmatpush1.xpose.msra.mxu0 0.0
  %1026 = vmatprep.subr.mxu0 0.0
  %1027 = vmatpush1.xpose.msra.mxu0 0.0
  %1028 = vmatprep.subr.mxu0 0.0
  %1029 = vmatpush1.xpose.msra.mxu0 0.0
  %1030 = vmatprep.subr.mxu0 0.0
  %1031 = vmatpush1.xpose.msra.mxu0 0.0
  %1032 = vmatprep.subr.mxu0 0.0
  %1033 = vmatpush1.xpose.msra.mxu0 0.0
  %1034 = vmatprep.subr.mxu0 0.0
  %1035 = vmatpush1.xpose.msra.mxu0 0.0
  %1036 = vmatprep.subr.mxu0 0.0
  %1037 = vmatpush1.xpose.msra.mxu0 0.0
  %1038 = vmatprep.subr.mxu0 0.0
  %1039 = vmatpush1.xpose.msra.mxu0 0.0
  %1040 = vmatprep.subr.mxu0 0.0
  %1041 = vmatpush1.xpose.msra.mxu0 0.0
  %1042 = vmatprep.subr.mxu0 0.0
  %1043 = vmatpush1.xpose.msra.mxu0 0.0
  %1044 = vmatprep.mubr.f32.mxu0 0.0
  %1045 = vmatmul.mubr.f32.gmra.mrb[0].mxu0 %v966
  %v1046 = vpop.f32.mrb[0].mxu0
  %v1047 = vadd.f32 0.0, %v1046
  %v1048 = vpop.f32.mrb[0].mxu0
  %1049 = vdwg.mxu0
  %vm1050 = vcmask 122880
  %v1051 = vsel %vm1050, %v1047, -inf
  %1052 = vmax.xlane.f32.xlu0 %v1051
  %v1053 = vpop.xlane.xlu0 %1052
  %v1054 = vsub.f32 %v1047, %v1053
  %v1055 = vmul.f32 %v1054, 1.442695
  %v1056 = vpow.pop %v1055
  %v1057 = vsel %vm1050, %v1056, 0.0
  %1058 = vadd.xlane.f32.xlu0 %v1057
  %v1059 = vpop.xlane.xlu0 %1058
  %v1060 = vrcp.pop %v1059
  %v1061 = vmul.f32 %v1056, %v1060
  %vm1062 = vcmask 130048
  %v1064 = vsel %vm1062, %v1061, 0
  %1066 = vmatprep.subr.mxu0 0.0
  %1067 = vmatpush1.msra.mxu0 %v842
  %1068 = vmatprep.subr.mxu0 0.0
  %1069 = vmatpush1.msra.mxu0 %v843
  %1070 = vmatprep.subr.mxu0 0.0
  %1071 = vmatpush1.msra.mxu0 0.0
  %1072 = vmatprep.subr.mxu0 0.0
  %1073 = vmatpush1.msra.mxu0 0.0
  %1074 = vmatprep.subr.mxu0 0.0
  %1075 = vmatpush1.msra.mxu0 0.0
  %1076 = vmatprep.subr.mxu0 0.0
  %1077 = vmatpush1.msra.mxu0 0.0
  %1078 = vmatprep.subr.mxu0 0.0
  %1079 = vmatpush1.msra.mxu0 0.0
  %1080 = vmatprep.subr.mxu0 0.0
  %1081 = vmatpush1.msra.mxu0 0.0
  %1082 = vmatprep.subr.mxu0 0.0
  %1083 = vmatpush1.msra.mxu0 0.0
  %1084 = vmatprep.subr.mxu0 0.0
  %1085 = vmatpush1.msra.mxu0 0.0
  %1086 = vmatprep.subr.mxu0 0.0
  %1087 = vmatpush1.msra.mxu0 0.0
  %1088 = vmatprep.subr.mxu0 0.0
  %1089 = vmatpush1.msra.mxu0 0.0
  %1090 = vmatprep.subr.mxu0 0.0
  %1091 = vmatpush1.msra.mxu0 0.0
  %1092 = vmatprep.subr.mxu0 0.0
  %1093 = vmatpush1.msra.mxu0 0.0
  %1094 = vmatprep.subr.mxu0 0.0
  %1095 = vmatpush1.msra.mxu0 0.0
  %1096 = vmatprep.subr.mxu0 0.0
  %1097 = vmatpush1.msra.mxu0 0.0
  %1098 = vmatprep.subr.mxu0 0.0
  %1099 = vmatpush1.msra.mxu0 0.0
  %1100 = vmatprep.subr.mxu0 0.0
  %1101 = vmatpush1.msra.mxu0 0.0
  %1102 = vmatprep.subr.mxu0 0.0
  %1103 = vmatpush1.msra.mxu0 0.0
  %1104 = vmatprep.subr.mxu0 0.0
  %1105 = vmatpush1.msra.mxu0 0.0
  %1106 = vmatprep.subr.mxu0 0.0
  %1107 = vmatpush1.msra.mxu0 0.0
  %1108 = vmatprep.subr.mxu0 0.0
  %1109 = vmatpush1.msra.mxu0 0.0
  %1110 = vmatprep.subr.mxu0 0.0
  %1111 = vmatpush1.msra.mxu0 0.0
  %1112 = vmatprep.subr.mxu0 0.0
  %1113 = vmatpush1.msra.mxu0 0.0
  %1114 = vmatprep.subr.mxu0 0.0
  %1115 = vmatpush1.msra.mxu0 0.0
  %1116 = vmatprep.subr.mxu0 0.0
  %1117 = vmatpush1.msra.mxu0 0.0
  %1118 = vmatprep.subr.mxu0 0.0
  %1119 = vmatpush1.msra.mxu0 0.0
  %1120 = vmatprep.subr.mxu0 0.0
  %1121 = vmatpush1.msra.mxu0 0.0
  %1122 = vmatprep.subr.mxu0 0.0
  %1123 = vmatpush1.msra.mxu0 0.0
  %1124 = vmatprep.subr.mxu0 0.0
  %1125 = vmatpush1.msra.mxu0 0.0
  %1126 = vmatprep.subr.mxu0 0.0
  %1127 = vmatpush1.msra.mxu0 0.0
  %1128 = vmatprep.subr.mxu0 0.0
  %1129 = vmatpush1.msra.mxu0 0.0
  %1130 = vmatprep.mubr.f32.mxu0 0.0
  %1131 = vmatmul.mubr.f32.gmra.mrb[0].mxu0 %v1064
  %v1132 = vpop.f32.mrb[0].mxu0
  %v1133 = vadd.f32 0.0, %v1132
  %v1134 = vpop.f32.mrb[0].mxu0
  %1135 = vdwg.mxu0
  %1136 = vrot.lane.b32.xlu0 %v20, 32
  %v1137 = vpop.permute.xlu0 %1136
  %1138 = vrot.lane.b32.xlu0 %v22, 32
  %v1139 = vpop.permute.xlu0 %1138
  %1140 = vrot.lane.b32.xlu0 %v24, 32
  %v1141 = vpop.permute.xlu0 %1140
  %1142 = vrot.lane.b32.xlu0 %v26, 32
  %v1143 = vpop.permute.xlu0 %1142
  %v1149 = vsel %vm35, %v1133, 0
  %1151 = vmatprep.subr.mxu0 0.0
  %1152 = vmatpush1.msra.mxu0 %v1137
  %1153 = vmatprep.subr.mxu0 0.0
  %1154 = vmatpush1.msra.mxu0 %v1139
  %1155 = vmatprep.subr.mxu0 0.0
  %1156 = vmatpush1.msra.mxu0 %v1141
  %1157 = vmatprep.subr.mxu0 0.0
  %1158 = vmatpush1.msra.mxu0 %v1143
  %1159 = vmatprep.subr.mxu0 0.0
  %1160 = vmatpush1.msra.mxu0 0.0
  %1161 = vmatprep.subr.mxu0 0.0
  %1162 = vmatpush1.msra.mxu0 0.0
  %1163 = vmatprep.subr.mxu0 0.0
  %1164 = vmatpush1.msra.mxu0 0.0
  %1165 = vmatprep.subr.mxu0 0.0
  %1166 = vmatpush1.msra.mxu0 0.0
  %1167 = vmatprep.subr.mxu0 0.0
  %1168 = vmatpush1.msra.mxu0 0.0
  %1169 = vmatprep.subr.mxu0 0.0
  %1170 = vmatpush1.msra.mxu0 0.0
  %1171 = vmatprep.subr.mxu0 0.0
  %1172 = vmatpush1.msra.mxu0 0.0
  %1173 = vmatprep.subr.mxu0 0.0
  %1174 = vmatpush1.msra.mxu0 0.0
  %1175 = vmatprep.subr.mxu0 0.0
  %1176 = vmatpush1.msra.mxu0 0.0
  %1177 = vmatprep.subr.mxu0 0.0
  %1178 = vmatpush1.msra.mxu0 0.0
  %1179 = vmatprep.subr.mxu0 0.0
  %1180 = vmatpush1.msra.mxu0 0.0
  %1181 = vmatprep.subr.mxu0 0.0
  %1182 = vmatpush1.msra.mxu0 0.0
  %1183 = vmatprep.subr.mxu0 0.0
  %1184 = vmatpush1.msra.mxu0 0.0
  %1185 = vmatprep.subr.mxu0 0.0
  %1186 = vmatpush1.msra.mxu0 0.0
  %1187 = vmatprep.subr.mxu0 0.0
  %1188 = vmatpush1.msra.mxu0 0.0
  %1189 = vmatprep.subr.mxu0 0.0
  %1190 = vmatpush1.msra.mxu0 0.0
  %1191 = vmatprep.subr.mxu0 0.0
  %1192 = vmatpush1.msra.mxu0 0.0
  %1193 = vmatprep.subr.mxu0 0.0
  %1194 = vmatpush1.msra.mxu0 0.0
  %1195 = vmatprep.subr.mxu0 0.0
  %1196 = vmatpush1.msra.mxu0 0.0
  %1197 = vmatprep.subr.mxu0 0.0
  %1198 = vmatpush1.msra.mxu0 0.0
  %1199 = vmatprep.subr.mxu0 0.0
  %1200 = vmatpush1.msra.mxu0 0.0
  %1201 = vmatprep.subr.mxu0 0.0
  %1202 = vmatpush1.msra.mxu0 0.0
  %1203 = vmatprep.subr.mxu0 0.0
  %1204 = vmatpush1.msra.mxu0 0.0
  %1205 = vmatprep.subr.mxu0 0.0
  %1206 = vmatpush1.msra.mxu0 0.0
  %1207 = vmatprep.subr.mxu0 0.0
  %1208 = vmatpush1.msra.mxu0 0.0
  %1209 = vmatprep.subr.mxu0 0.0
  %1210 = vmatpush1.msra.mxu0 0.0
  %1211 = vmatprep.subr.mxu0 0.0
  %1212 = vmatpush1.msra.mxu0 0.0
  %1213 = vmatprep.subr.mxu0 0.0
  %1214 = vmatpush1.msra.mxu0 0.0
  %1215 = vmatprep.mubr.f32.mxu0 0.0
  %1216 = vmatmul.mubr.f32.gmra.mrb[0].mxu0 %v1149
  %v1217 = vpop.f32.mrb[0].mxu0
  %v1218 = vadd.f32 0.0, %v1217
  %v1219 = vpop.f32.mrb[0].mxu0
  %1220 = vdwg.mxu0
  %1222 = vrot.lane.b32.xlu0 %v451, 61
  %v1223 = vpop.permute.xlu0 %1222
  %v1225 = vmul.f32 %v1218, %v1223
  %vm1226 = vcmask 254080
  %v1227 = vsel %vm1226, %v1047, -inf
  %1228 = vmax.xlane.f32.xlu0 %v1227
  %v1229 = vpop.xlane.xlu0 %1228
  %v1230 = vsub.f32 %v1047, %v1229
  %v1231 = vmul.f32 %v1230, 1.442695
  %v1232 = vpow.pop %v1231
  %1234 = vrot.lane.b32.xlu0 %v1232, 112
  %v1235 = vpop.permute.xlu0 %1234
  %v1237 = vsel %vm1050, %v1235, 0.0
  %1238 = vadd.xlane.f32.xlu0 %v1237
  %v1239 = vpop.xlane.xlu0 %1238
  %v1240 = vrcp.pop %v1239
  %v1241 = vmul.f32 %v1232, %v1240
  %1243 = vrot.lane.b32.xlu0 %v1241, 112
  %v1244 = vpop.permute.xlu0 %1243
  %v1245 = vsel %vm1062, %v1244, 0
  %1247 = vmatprep.subr.mxu0 0.0
  %1248 = vmatpush1.msra.mxu0 %v844
  %1249 = vmatprep.subr.mxu0 0.0
  %1250 = vmatpush1.msra.mxu0 %v845
  %1251 = vmatprep.subr.mxu0 0.0
  %1252 = vmatpush1.msra.mxu0 0.0
  %1253 = vmatprep.subr.mxu0 0.0
  %1254 = vmatpush1.msra.mxu0 0.0
  %1255 = vmatprep.subr.mxu0 0.0
  %1256 = vmatpush1.msra.mxu0 0.0
  %1257 = vmatprep.subr.mxu0 0.0
  %1258 = vmatpush1.msra.mxu0 0.0
  %1259 = vmatprep.subr.mxu0 0.0
  %1260 = vmatpush1.msra.mxu0 0.0
  %1261 = vmatprep.subr.mxu0 0.0
  %1262 = vmatpush1.msra.mxu0 0.0
  %1263 = vmatprep.subr.mxu0 0.0
  %1264 = vmatpush1.msra.mxu0 0.0
  %1265 = vmatprep.subr.mxu0 0.0
  %1266 = vmatpush1.msra.mxu0 0.0
  %1267 = vmatprep.subr.mxu0 0.0
  %1268 = vmatpush1.msra.mxu0 0.0
  %1269 = vmatprep.subr.mxu0 0.0
  %1270 = vmatpush1.msra.mxu0 0.0
  %1271 = vmatprep.subr.mxu0 0.0
  %1272 = vmatpush1.msra.mxu0 0.0
  %1273 = vmatprep.subr.mxu0 0.0
  %1274 = vmatpush1.msra.mxu0 0.0
  %1275 = vmatprep.subr.mxu0 0.0
  %1276 = vmatpush1.msra.mxu0 0.0
  %1277 = vmatprep.subr.mxu0 0.0
  %1278 = vmatpush1.msra.mxu0 0.0
  %1279 = vmatprep.subr.mxu0 0.0
  %1280 = vmatpush1.msra.mxu0 0.0
  %1281 = vmatprep.subr.mxu0 0.0
  %1282 = vmatpush1.msra.mxu0 0.0
  %1283 = vmatprep.subr.mxu0 0.0
  %1284 = vmatpush1.msra.mxu0 0.0
  %1285 = vmatprep.subr.mxu0 0.0
  %1286 = vmatpush1.msra.mxu0 0.0
  %1287 = vmatprep.subr.mxu0 0.0
  %1288 = vmatpush1.msra.mxu0 0.0
  %1289 = vmatprep.subr.mxu0 0.0
  %1290 = vmatpush1.msra.mxu0 0.0
  %1291 = vmatprep.subr.mxu0 0.0
  %1292 = vmatpush1.msra.mxu0 0.0
  %1293 = vmatprep.subr.mxu0 0.0
  %1294 = vmatpush1.msra.mxu0 0.0
  %1295 = vmatprep.subr.mxu0 0.0
  %1296 = vmatpush1.msra.mxu0 0.0
  %1297 = vmatprep.subr.mxu0 0.0
  %1298 = vmatpush1.msra.mxu0 0.0
  %1299 = vmatprep.subr.mxu0 0.0
  %1300 = vmatpush1.msra.mxu0 0.0
  %1301 = vmatprep.subr.mxu0 0.0
  %1302 = vmatpush1.msra.mxu0 0.0
  %1303 = vmatprep.subr.mxu0 0.0
  %1304 = vmatpush1.msra.mxu0 0.0
  %1305 = vmatprep.subr.mxu0 0.0
  %1306 = vmatpush1.msra.mxu0 0.0
  %1307 = vmatprep.subr.mxu0 0.0
  %1308 = vmatpush1.msra.mxu0 0.0
  %1309 = vmatprep.subr.mxu0 0.0
  %1310 = vmatpush1.msra.mxu0 0.0
  %1311 = vmatprep.mubr.f32.mxu0 0.0
  %1312 = vmatmul.mubr.f32.gmra.mrb[0].mxu0 %v1245
  %v1313 = vpop.f32.mrb[0].mxu0
  %v1314 = vadd.f32 0.0, %v1313
  %v1315 = vpop.f32.mrb[0].mxu0
  %1316 = vdwg.mxu0
  %v1318 = vsel %vm35, %v1314, 0
  %1320 = vmatprep.subr.mxu0 0.0
  %1321 = vmatpush1.msra.mxu0 %v1137
  %1322 = vmatprep.subr.mxu0 0.0
  %1323 = vmatpush1.msra.mxu0 %v1139
  %1324 = vmatprep.subr.mxu0 0.0
  %1325 = vmatpush1.msra.mxu0 %v1141
  %1326 = vmatprep.subr.mxu0 0.0
  %1327 = vmatpush1.msra.mxu0 %v1143
  %1328 = vmatprep.subr.mxu0 0.0
  %1329 = vmatpush1.msra.mxu0 0.0
  %1330 = vmatprep.subr.mxu0 0.0
  %1331 = vmatpush1.msra.mxu0 0.0
  %1332 = vmatprep.subr.mxu0 0.0
  %1333 = vmatpush1.msra.mxu0 0.0
  %1334 = vmatprep.subr.mxu0 0.0
  %1335 = vmatpush1.msra.mxu0 0.0
  %1336 = vmatprep.subr.mxu0 0.0
  %1337 = vmatpush1.msra.mxu0 0.0
  %1338 = vmatprep.subr.mxu0 0.0
  %1339 = vmatpush1.msra.mxu0 0.0
  %1340 = vmatprep.subr.mxu0 0.0
  %1341 = vmatpush1.msra.mxu0 0.0
  %1342 = vmatprep.subr.mxu0 0.0
  %1343 = vmatpush1.msra.mxu0 0.0
  %1344 = vmatprep.subr.mxu0 0.0
  %1345 = vmatpush1.msra.mxu0 0.0
  %1346 = vmatprep.subr.mxu0 0.0
  %1347 = vmatpush1.msra.mxu0 0.0
  %1348 = vmatprep.subr.mxu0 0.0
  %1349 = vmatpush1.msra.mxu0 0.0
  %1350 = vmatprep.subr.mxu0 0.0
  %1351 = vmatpush1.msra.mxu0 0.0
  %1352 = vmatprep.subr.mxu0 0.0
  %1353 = vmatpush1.msra.mxu0 0.0
  %1354 = vmatprep.subr.mxu0 0.0
  %1355 = vmatpush1.msra.mxu0 0.0
  %1356 = vmatprep.subr.mxu0 0.0
  %1357 = vmatpush1.msra.mxu0 0.0
  %1358 = vmatprep.subr.mxu0 0.0
  %1359 = vmatpush1.msra.mxu0 0.0
  %1360 = vmatprep.subr.mxu0 0.0
  %1361 = vmatpush1.msra.mxu0 0.0
  %1362 = vmatprep.subr.mxu0 0.0
  %1363 = vmatpush1.msra.mxu0 0.0
  %1364 = vmatprep.subr.mxu0 0.0
  %1365 = vmatpush1.msra.mxu0 0.0
  %1366 = vmatprep.subr.mxu0 0.0
  %1367 = vmatpush1.msra.mxu0 0.0
  %1368 = vmatprep.subr.mxu0 0.0
  %1369 = vmatpush1.msra.mxu0 0.0
  %1370 = vmatprep.subr.mxu0 0.0
  %1371 = vmatpush1.msra.mxu0 0.0
  %1372 = vmatprep.subr.mxu0 0.0
  %1373 = vmatpush1.msra.mxu0 0.0
  %1374 = vmatprep.subr.mxu0 0.0
  %1375 = vmatpush1.msra.mxu0 0.0
  %1376 = vmatprep.subr.mxu0 0.0
  %1377 = vmatpush1.msra.mxu0 0.0
  %1378 = vmatprep.subr.mxu0 0.0
  %1379 = vmatpush1.msra.mxu0 0.0
  %1380 = vmatprep.subr.mxu0 0.0
  %1381 = vmatpush1.msra.mxu0 0.0
  %1382 = vmatprep.subr.mxu0 0.0
  %1383 = vmatpush1.msra.mxu0 0.0
  %1384 = vmatprep.mubr.f32.mxu0 0.0
  %1385 = vmatmul.mubr.f32.gmra.mrb[0].mxu0 %v1318
  %v1386 = vpop.f32.mrb[0].mxu0
  %v1387 = vadd.f32 0.0, %v1386
  %v1388 = vpop.f32.mrb[0].mxu0
  %1389 = vdwg.mxu0
  %v1390 = vrot.slane %v451, 1
  %1391 = vrot.lane.b32.xlu0 %v1390, 61
  %v1392 = vpop.permute.xlu0 %1391
  %v1394 = vmul.f32 %v1387, %v1392
  %v1396 = vrot.slane %v1394, 7
  %v1398 = vsel %vm379, %v1225, %v1396
  %v1399 = vrot.slane %v1241, 7
  %1400 = vrot.lane.b32.xlu0 %v1399, 112
  %v1401 = vpop.permute.xlu0 %1400
  %v1403 = vsel %vm379, %v1061, %v1401
  %v1404 = vlaneseq
  %v1405 = vshrl.u32 %v1404, 7
  %v1406 = vsub.s32 2, %v1405
  %v1407 = vrot.slane %v28, %v1406
  %1412 = vrot.lane.b32.xlu0 %v21, 29
  %v1413 = vpop.permute.xlu0 %1412
  %1414 = vrot.lane.b32.xlu0 %v23, 29
  %v1415 = vpop.permute.xlu0 %1414
  %1416 = vrot.lane.b32.xlu0 %v25, 29
  %v1417 = vpop.permute.xlu0 %1416
  %1418 = vrot.lane.b32.xlu0 %v27, 29
  %v1419 = vpop.permute.xlu0 %1418
  %v1425 = vsel %vm35, %v1398, 0
  %1427 = vmatprep.subr.mxu0 0.0
  %1428 = vmatpush1.msra.mxu0 %v1413
  %1429 = vmatprep.subr.mxu0 0.0
  %1430 = vmatpush1.msra.mxu0 %v1415
  %1431 = vmatprep.subr.mxu0 0.0
  %1432 = vmatpush1.msra.mxu0 %v1417
  %1433 = vmatprep.subr.mxu0 0.0
  %1434 = vmatpush1.msra.mxu0 %v1419
  %1435 = vmatprep.subr.mxu0 0.0
  %1436 = vmatpush1.msra.mxu0 0.0
  %1437 = vmatprep.subr.mxu0 0.0
  %1438 = vmatpush1.msra.mxu0 0.0
  %1439 = vmatprep.subr.mxu0 0.0
  %1440 = vmatpush1.msra.mxu0 0.0
  %1441 = vmatprep.subr.mxu0 0.0
  %1442 = vmatpush1.msra.mxu0 0.0
  %1443 = vmatprep.subr.mxu0 0.0
  %1444 = vmatpush1.msra.mxu0 0.0
  %1445 = vmatprep.subr.mxu0 0.0
  %1446 = vmatpush1.msra.mxu0 0.0
  %1447 = vmatprep.subr.mxu0 0.0
  %1448 = vmatpush1.msra.mxu0 0.0
  %1449 = vmatprep.subr.mxu0 0.0
  %1450 = vmatpush1.msra.mxu0 0.0
  %1451 = vmatprep.subr.mxu0 0.0
  %1452 = vmatpush1.msra.mxu0 0.0
  %1453 = vmatprep.subr.mxu0 0.0
  %1454 = vmatpush1.msra.mxu0 0.0
  %1455 = vmatprep.subr.mxu0 0.0
  %1456 = vmatpush1.msra.mxu0 0.0
  %1457 = vmatprep.subr.mxu0 0.0
  %1458 = vmatpush1.msra.mxu0 0.0
  %1459 = vmatprep.subr.mxu0 0.0
  %1460 = vmatpush1.msra.mxu0 0.0
  %1461 = vmatprep.subr.mxu0 0.0
  %1462 = vmatpush1.msra.mxu0 0.0
  %1463 = vmatprep.subr.mxu0 0.0
  %1464 = vmatpush1.msra.mxu0 0.0
  %1465 = vmatprep.subr.mxu0 0.0
  %1466 = vmatpush1.msra.mxu0 0.0
  %1467 = vmatprep.subr.mxu0 0.0
  %1468 = vmatpush1.msra.mxu0 0.0
  %1469 = vmatprep.subr.mxu0 0.0
  %1470 = vmatpush1.msra.mxu0 0.0
  %1471 = vmatprep.subr.mxu0 0.0
  %1472 = vmatpush1.msra.mxu0 0.0
  %1473 = vmatprep.subr.mxu0 0.0
  %1474 = vmatpush1.msra.mxu0 0.0
  %1475 = vmatprep.subr.mxu0 0.0
  %1476 = vmatpush1.msra.mxu0 0.0
  %1477 = vmatprep.subr.mxu0 0.0
  %1478 = vmatpush1.msra.mxu0 0.0
  %1479 = vmatprep.subr.mxu0 0.0
  %1480 = vmatpush1.msra.mxu0 0.0
  %1481 = vmatprep.subr.mxu0 0.0
  %1482 = vmatpush1.msra.mxu0 0.0
  %1483 = vmatprep.subr.mxu0 0.0
  %1484 = vmatpush1.msra.mxu0 0.0
  %1485 = vmatprep.subr.mxu0 0.0
  %1486 = vmatpush1.msra.mxu0 0.0
  %1487 = vmatprep.subr.mxu0 0.0
  %1488 = vmatpush1.msra.mxu0 0.0
  %1489 = vmatprep.subr.mxu0 0.0
  %1490 = vmatpush1.msra.mxu0 0.0
  %1491 = vmatprep.mubr.f32.mxu0 0.0
  %1492 = vmatmul.mubr.f32.gmra.mrb[0].mxu0 %v1425
  %v1493 = vpop.f32.mrb[0].mxu0
  %v1494 = vadd.f32 %v1407, %v1493
  %v1495 = vpop.f32.mrb[0].mxu0
  %1496 = vdwg.mxu0
  %1498 = vrot.lane.b32.xlu0 %v1494, 3
  %v1499 = vpop.permute.xlu0 %1498
  %1502 = vrot.lane.b32.xlu0 %v1403, 19
  %v1503 = vpop.permute.xlu0 %1502
  %vm1505 = vcmask 23552
  %v1506 = vsel %vm1505, %v458, %v1499
  %vm1507 = vcmask 154624
  %v1508 = vsel %vm1507, %v1506, %v1503
  %vm1509 = vcmask 285696
  %v1510 = vsel %vm1509, %v1508, 0.0
  %1511 = vst [vmem:[%s5] sm:$0x3] %v1510
  // Predicated region
  $region22: #{regat_forward.1} parent=0 // pred_check
    _
  $region23: #{regat_forward.1} parent=0 // pred_check_branch
    %1513 = sbr.rel (0) target = $region25
  $region24: #{regat_forward.1} parent=0 // pred_region
    _
  $region25: #{regat_forward.1} parent=0 // pred_fallthru
    _
  // Predicated region
  $region26: #{regat_forward.1} parent=0 // pred_check
    _
  $region27: #{regat_forward.1} parent=0 // pred_check_branch
    %1515 = sbr.rel (0) target = $region29
  $region28: #{regat_forward.1} parent=0 // pred_region
    _
  $region29: #{regat_forward.1} parent=0 // pred_fallthru
    _

</llo_original>
